<compile_context>
chip_gen: v7x
topology: tpu7x:2x2x1
jax: 0.10.0
libtpu: 0.0.40
codegen_flags: <defaults>
</compile_context>

<pallas_src>
import jax
import jax.numpy as jnp
from jax.experimental import pallas as pl
from jax.experimental.pallas import tpu as pltpu


# ------------------------- Pallas kernels -------------------------

def conv_pool_kernel(w_ref, b_ref, p_ref, o_ref):
    """Fused (conv as matmul) + bias + 2x2/stride-2 max-pool.

    w_ref: (Cout, K)    flattened conv weight, K ordered (cin, kh, kw)
    b_ref: (Cout, 1)    bias
    p_ref: (4, K, TM)   quadrant im2col patches; axis 0 = position inside the 2x2 pool window
    o_ref: (Cout, TM)   pooled + biased output tile (channel-major, lane-dense)
    """
    w = w_ref[...]
    m0 = jnp.dot(w, p_ref[0], preferred_element_type=jnp.float32)
    m1 = jnp.dot(w, p_ref[1], preferred_element_type=jnp.float32)
    m2 = jnp.dot(w, p_ref[2], preferred_element_type=jnp.float32)
    m3 = jnp.dot(w, p_ref[3], preferred_element_type=jnp.float32)
    pooled = jnp.maximum(jnp.maximum(m0, m1), jnp.maximum(m2, m3)) + b_ref[...]
    o_ref[...] = pooled.astype(o_ref.dtype)


def head_kernel(w1_ref, b1_ref, w2_ref, b2_ref, f_ref, o_ref):
    """Fused fc1 + relu + fc2 + log_softmax (channel-major: batch in lanes).

    f_ref: (K1, TB)   flattened features, rows ordered (c, h, w) = PyTorch .view order
    o_ref: (nCls, TB) log-probabilities (classes on sublanes, batch on lanes)
    """
    h = jnp.dot(w1_ref[...], f_ref[...], preferred_element_type=jnp.float32) + b1_ref[...]
    h = jnp.maximum(h, 0.0)
    z = jnp.dot(w2_ref[...], h, preferred_element_type=jnp.float32) + b2_ref[...]
    m = jnp.max(z, axis=0, keepdims=True)
    s = z - m
    lse = jnp.log(jnp.sum(jnp.exp(s), axis=0, keepdims=True))
    o_ref[...] = (s - lse).astype(o_ref.dtype)


# ------------------------- wrappers -------------------------

def _quadrant_patches(x_cm, kh, kw, batch_minor):
    """Pool-quadrant im2col from a channel-major activation.

    x_cm: (Cin, B, H, W).
    Returns (patches, OH2, OW2) with patches: (4, Cin*kh*kw, M) where
      quadrant q = py*2 + px (position inside the 2x2 pool window),
      K ordered (cin, kh, kw)  -- matches weight.reshape(Cout, -1),
      M ordered (b, oh2, ow2) if not batch_minor else (oh2, ow2, b).
    """
    C, B, H, W = x_cm.shape
    OH2, OW2 = (H - kh + 1) // 2, (W - kw + 1) // 2
    quads = []
    for py in range(2):
        for px in range(2):
            taps = []
            for i in range(kh):
                for j in range(kw):
                    taps.append(
                        x_cm[:, :,
                             py + i: py + i + 2 * OH2: 2,
                             px + j: px + j + 2 * OW2: 2])       # (C, B, OH2, OW2)
            t = jnp.stack(taps, axis=1)                           # (C, kh*kw, B, OH2, OW2)
            if batch_minor:
                t = jnp.transpose(t, (0, 1, 3, 4, 2))             # (C, kh*kw, OH2, OW2, B)
                t = t.reshape(C * kh * kw, OH2 * OW2 * B)
            else:
                t = t.reshape(C * kh * kw, B * OH2 * OW2)
            quads.append(t)
    return jnp.stack(quads, axis=0), OH2, OW2


def conv_pool_cm(x_cm, w, b, *, batch_minor=False, tile_m=512):
    """'valid' conv (stride 1) + bias + 2x2/2 max-pool; channel-major in/out."""
    Cin, B, H, W = x_cm.shape
    Cout, _, kh, kw = w.shape
    patches, OH2, OW2 = _quadrant_patches(x_cm, kh, kw, batch_minor)
    K = Cin * kh * kw
    M = patches.shape[-1]
    if M <= tile_m:
        TM, grid = M, 1                      # full extent (no lane-alignment constraint)
    else:
        TM, grid = tile_m, pl.cdiv(M, tile_m)  # 512 lanes/tile, partial edge block masked

    wmat = w.reshape(Cout, K)                # no transpose: used directly as matmul LHS
    bmat = b.reshape(Cout, 1)

    out = pl.pallas_call(
        conv_pool_kernel,
        out_shape=jax.ShapeDtypeStruct((Cout, M), jnp.float32),
        grid=(grid,),
        in_specs=[
            pl.BlockSpec((Cout, K), lambda m: (0, 0)),
            pl.BlockSpec((Cout, 1), lambda m: (0, 0)),
            pl.BlockSpec((4, K, TM), lambda m: (0, 0, m)),
        ],
        out_specs=pl.BlockSpec((Cout, TM), lambda m: (0, m)),
        compiler_params=pltpu.CompilerParams(dimension_semantics=("parallel",)),
    )(wmat, bmat, patches)
    return out, OH2, OW2


def head(feat_t, w1, b1, w2, b2, *, tile_b=256):
    """Fused fc1+relu -> fc2 -> log_softmax.  feat_t: (K1, B) channel-major features."""
    K1, B = feat_t.shape
    nH = w1.shape[0]
    nCls = w2.shape[0]
    if B <= tile_b:
        TB, grid = B, 1
    else:
        TB, grid = tile_b, pl.cdiv(B, tile_b)
    return pl.pallas_call(
        head_kernel,
        out_shape=jax.ShapeDtypeStruct((nCls, B), jnp.float32),
        grid=(grid,),
        in_specs=[
            pl.BlockSpec((nH, K1), lambda m: (0, 0)),
            pl.BlockSpec((nH, 1), lambda m: (0, 0)),
            pl.BlockSpec((nCls, nH), lambda m: (0, 0)),
            pl.BlockSpec((nCls, 1), lambda m: (0, 0)),
            pl.BlockSpec((K1, TB), lambda m: (0, m)),
        ],
        out_specs=pl.BlockSpec((nCls, TB), lambda m: (0, m)),
        compiler_params=pltpu.CompilerParams(dimension_semantics=("parallel",)),
    )(w1, b1.reshape(nH, 1), w2, b2.reshape(nCls, 1), feat_t)


# ------------------------- LeNet -------------------------

def init_params(key, nHidden=32, nCls=10):
    keys = jax.random.split(key, 8)

    def u(k, shape, fan_in):
        bound = 1.0 / float(fan_in) ** 0.5
        return jax.random.uniform(k, shape, jnp.float32, -bound, bound)

    return {
        "conv1_w": u(keys[0], (20, 1, 5, 5), 1 * 5 * 5),
        "conv1_b": u(keys[1], (20,), 1 * 5 * 5),
        "conv2_w": u(keys[2], (50, 20, 5, 5), 20 * 5 * 5),
        "conv2_b": u(keys[3], (50,), 20 * 5 * 5),
        "fc1_w": u(keys[4], (nHidden, 50 * 4 * 4), 50 * 4 * 4),
        "fc1_b": u(keys[5], (nHidden,), 50 * 4 * 4),
        "fc2_w": u(keys[6], (nCls, nHidden), nHidden),
        "fc2_b": u(keys[7], (nCls,), nHidden),
    }


def lenet_forward(params, x):
    # x: (B, 1, 28, 28) NCHW (28x28 input required by fc1 = 50*4*4 features)
    B = x.shape[0]
    c1w, c1b = params["conv1_w"], params["conv1_b"]
    c2w, c2b = params["conv2_w"], params["conv2_b"]

    x_cm = jnp.transpose(x, (1, 0, 2, 3))                      # (1, B, 28, 28) channel-major
    out1, oh1, ow1 = conv_pool_cm(x_cm, c1w, c1b)              # (20, B*12*12), M=(b, oh, ow)
    p1_cm = out1.reshape(c1w.shape[0], B, oh1, ow1)            # (20, B, 12, 12) -- pure reshape

    out2, oh2, ow2 = conv_pool_cm(p1_cm, c2w, c2b, batch_minor=True)  # (50, 16*B), M=(hw, b)
    feat_t = out2.reshape(c2w.shape[0] * oh2 * ow2, B)         # (800, B), rows = (c, h, w)

    logp_t = head(feat_t, params["fc1_w"], params["fc1_b"],
                  params["fc2_w"], params["fc2_b"])            # (nCls, B)
    return logp_t.T                                            # (B, nCls)


# ------------------------- pure-JAX reference (correctness check) -------------------------

def lenet_reference(params, x):
    def conv(y, w, b):
        dn = jax.lax.conv_dimension_numbers(y.shape, w.shape, ("NCHW", "OIHW", "NCHW"))
        y = jax.lax.conv_general_dilated(y, w, (1, 1), "VALID", dimension_numbers=dn)
        return y + b.reshape(1, -1, 1, 1)

    def pool(y):
        return jax.lax.reduce_window(y, -jnp.inf, jax.lax.max,
                                     (1, 1, 2, 2), (1, 1, 2, 2), "VALID")

    y = pool(conv(x, params["conv1_w"], params["conv1_b"]))
    y = pool(conv(y, params["conv2_w"], params["conv2_b"]))
    y = y.reshape(y.shape[0], -1)
    y = jnp.maximum(y @ params["fc1_w"].T + params["fc1_b"], 0.0)
    y = y @ params["fc2_w"].T + params["fc2_b"]
    return jax.nn.log_softmax(y, axis=-1)


if __name__ == "__main__":
    key = jax.random.PRNGKey(0)
    pkey, xkey = jax.random.split(key)
    params = init_params(pkey, nHidden=32, nCls=10)
    x = jax.random.normal(xkey, (2, 1, 28, 28), jnp.float32)

    out = jax.block_until_ready(jax.jit(lenet_forward)(params, x))
    assert out.shape == (2, 10)

    ref = jax.block_until_ready(jax.jit(lenet_reference)(params, x))
    max_err = float(jnp.max(jnp.abs(out - ref)))
    assert jnp.allclose(out, ref, atol=5e-2, rtol=5e-2), max_err

    print("KERNEL_OK")
</pallas_src>

<mosaic_0001>
module attributes {stable_mosaic.version = 11 : i64} {
  func.func @conv_pool_kernel(%arg0: i32, %arg1: memref<20x25xf32, #tpu.memory_space<vmem>>, %arg2: memref<20x1xf32, #tpu.memory_space<vmem>>, %arg3: memref<4x25x288xf32, #tpu.memory_space<vmem>>, %arg4: memref<20x288xf32, #tpu.memory_space<vmem>>) attributes {dimension_semantics = [#tpu.dimension_semantics<parallel>], iteration_bounds = array<i64: 1>, scalar_prefetch = 0 : i64, scratch_operands = 0 : i64, tpu.core_type = #tpu.core_type<tc>, window_params = [{pipeline_mode = #tpu.pipeline_mode<synchronous>, transform_indices = @transform_0, window_bounds = array<i64: 20, 25>}, {pipeline_mode = #tpu.pipeline_mode<synchronous>, transform_indices = @transform_1, window_bounds = array<i64: 20, 1>}, {transform_indices = @transform_2, window_bounds = array<i64: 4, 25, 288>}, {transform_indices = @transform_3, window_bounds = array<i64: 20, 288>}]} {
    %c0 = arith.constant 0 : index
    %c0_0 = arith.constant 0 : index
    %0 = vector.load %arg1[%c0, %c0_0] : memref<20x25xf32, #tpu.memory_space<vmem>>, vector<20x25xf32>
    %c0_1 = arith.constant 0 : index
    %c0_2 = arith.constant 0 : index
    %c0_3 = arith.constant 0 : index
    %1 = vector.load %arg3[%c0_1, %c0_2, %c0_3] : memref<4x25x288xf32, #tpu.memory_space<vmem>>, vector<1x25x288xf32>
    %2 = vector.shape_cast %1 : vector<1x25x288xf32> to vector<25x288xf32>
    %cst = arith.constant dense<0.000000e+00> : vector<20x288xf32>
    %3 = tpu.matmul %0, %2, %cst {dimension_numbers = #tpu.dot_dimension_numbers<[1], [0], [0], [1], [0, 0, 1, 1], [], []>} : vector<20x25xf32>, vector<25x288xf32>, vector<20x288xf32> -> vector<20x288xf32>
    %c1 = arith.constant 1 : index
    %c0_4 = arith.constant 0 : index
    %c0_5 = arith.constant 0 : index
    %4 = vector.load %arg3[%c1, %c0_4, %c0_5] : memref<4x25x288xf32, #tpu.memory_space<vmem>>, vector<1x25x288xf32>
    %5 = vector.shape_cast %4 : vector<1x25x288xf32> to vector<25x288xf32>
    %cst_6 = arith.constant dense<0.000000e+00> : vector<20x288xf32>
    %6 = tpu.matmul %0, %5, %cst_6 {dimension_numbers = #tpu.dot_dimension_numbers<[1], [0], [0], [1], [0, 0, 1, 1], [], []>} : vector<20x25xf32>, vector<25x288xf32>, vector<20x288xf32> -> vector<20x288xf32>
    %c2 = arith.constant 2 : index
    %c0_7 = arith.constant 0 : index
    %c0_8 = arith.constant 0 : index
    %7 = vector.load %arg3[%c2, %c0_7, %c0_8] : memref<4x25x288xf32, #tpu.memory_space<vmem>>, vector<1x25x288xf32>
    %8 = vector.shape_cast %7 : vector<1x25x288xf32> to vector<25x288xf32>
    %cst_9 = arith.constant dense<0.000000e+00> : vector<20x288xf32>
    %9 = tpu.matmul %0, %8, %cst_9 {dimension_numbers = #tpu.dot_dimension_numbers<[1], [0], [0], [1], [0, 0, 1, 1], [], []>} : vector<20x25xf32>, vector<25x288xf32>, vector<20x288xf32> -> vector<20x288xf32>
    %c3 = arith.constant 3 : index
    %c0_10 = arith.constant 0 : index
    %c0_11 = arith.constant 0 : index
    %10 = vector.load %arg3[%c3, %c0_10, %c0_11] : memref<4x25x288xf32, #tpu.memory_space<vmem>>, vector<1x25x288xf32>
    %11 = vector.shape_cast %10 : vector<1x25x288xf32> to vector<25x288xf32>
    %cst_12 = arith.constant dense<0.000000e+00> : vector<20x288xf32>
    %12 = tpu.matmul %0, %11, %cst_12 {dimension_numbers = #tpu.dot_dimension_numbers<[1], [0], [0], [1], [0, 0, 1, 1], [], []>} : vector<20x25xf32>, vector<25x288xf32>, vector<20x288xf32> -> vector<20x288xf32>
    %13 = arith.maximumf %3, %6 : vector<20x288xf32>
    %14 = arith.maximumf %9, %12 : vector<20x288xf32>
    %15 = arith.maximumf %13, %14 : vector<20x288xf32>
    %c0_13 = arith.constant 0 : index
    %c0_14 = arith.constant 0 : index
    %16 = vector.load %arg2[%c0_13, %c0_14] : memref<20x1xf32, #tpu.memory_space<vmem>>, vector<20x1xf32>
    %17 = vector.broadcast %16 : vector<20x1xf32> to vector<20x288xf32>
    %18 = arith.addf %15, %17 : vector<20x288xf32>
    %c0_15 = arith.constant 0 : index
    %c0_16 = arith.constant 0 : index
    %19 = vector.load %arg4[%c0_15, %c0_16] : memref<20x288xf32, #tpu.memory_space<vmem>>, vector<20x288xf32>
    tpu.vector_store %arg4[%c0_15, %c0_16], %18 {strides = array<i32>} : memref<20x288xf32, #tpu.memory_space<vmem>>, vector<20x288xf32>,
    return
  }
  func.func @transform_0(%arg0: i32) -> (i32, i32) {
    %c0_i32 = arith.constant 0 : i32
    %c0_i32_0 = arith.constant 0 : i32
    %c0_i32_1 = arith.constant 0 : i32
    return %c0_i32, %c0_i32_0 : i32, i32
  }
  func.func @transform_1(%arg0: i32) -> (i32, i32) {
    %c0_i32 = arith.constant 0 : i32
    %c0_i32_0 = arith.constant 0 : i32
    %c0_i32_1 = arith.constant 0 : i32
    return %c0_i32, %c0_i32_0 : i32, i32
  }
  func.func @transform_2(%arg0: i32) -> (i32, i32, i32) {
    %c0_i32 = arith.constant 0 : i32
    %c0_i32_0 = arith.constant 0 : i32
    %c0_i32_1 = arith.constant 0 : i32
    return %c0_i32, %c0_i32_0, %arg0 : i32, i32, i32
  }
  func.func @transform_3(%arg0: i32) -> (i32, i32) {
    %c0_i32 = arith.constant 0 : i32
    %c0_i32_0 = arith.constant 0 : i32
    return %c0_i32, %arg0 : i32, i32
  }
}

module attributes {stable_mosaic.version = 11 : i64} {
  func.func @conv_pool_kernel(%arg0: i32, %arg1: memref<50x500xf32, #tpu.memory_space<vmem>>, %arg2: memref<50x1xf32, #tpu.memory_space<vmem>>, %arg3: memref<4x500x32xf32, #tpu.memory_space<vmem>>, %arg4: memref<50x32xf32, #tpu.memory_space<vmem>>) attributes {dimension_semantics = [#tpu.dimension_semantics<parallel>], iteration_bounds = array<i64: 1>, scalar_prefetch = 0 : i64, scratch_operands = 0 : i64, tpu.core_type = #tpu.core_type<tc>, window_params = [{pipeline_mode = #tpu.pipeline_mode<synchronous>, transform_indices = @transform_0, window_bounds = array<i64: 50, 500>}, {pipeline_mode = #tpu.pipeline_mode<synchronous>, transform_indices = @transform_1, window_bounds = array<i64: 50, 1>}, {transform_indices = @transform_2, window_bounds = array<i64: 4, 500, 32>}, {transform_indices = @transform_3, window_bounds = array<i64: 50, 32>}]} {
    %c0 = arith.constant 0 : index
    %c0_0 = arith.constant 0 : index
    %0 = vector.load %arg1[%c0, %c0_0] : memref<50x500xf32, #tpu.memory_space<vmem>>, vector<50x500xf32>
    %c0_1 = arith.constant 0 : index
    %c0_2 = arith.constant 0 : index
    %c0_3 = arith.constant 0 : index
    %1 = vector.load %arg3[%c0_1, %c0_2, %c0_3] : memref<4x500x32xf32, #tpu.memory_space<vmem>>, vector<1x500x32xf32>
    %2 = vector.shape_cast %1 : vector<1x500x32xf32> to vector<500x32xf32>
    %cst = arith.constant dense<0.000000e+00> : vector<50x32xf32>
    %3 = tpu.matmul %0, %2, %cst {dimension_numbers = #tpu.dot_dimension_numbers<[1], [0], [0], [1], [0, 0, 1, 1], [], []>} : vector<50x500xf32>, vector<500x32xf32>, vector<50x32xf32> -> vector<50x32xf32>
    %c1 = arith.constant 1 : index
    %c0_4 = arith.constant 0 : index
    %c0_5 = arith.constant 0 : index
    %4 = vector.load %arg3[%c1, %c0_4, %c0_5] : memref<4x500x32xf32, #tpu.memory_space<vmem>>, vector<1x500x32xf32>
    %5 = vector.shape_cast %4 : vector<1x500x32xf32> to vector<500x32xf32>
    %cst_6 = arith.constant dense<0.000000e+00> : vector<50x32xf32>
    %6 = tpu.matmul %0, %5, %cst_6 {dimension_numbers = #tpu.dot_dimension_numbers<[1], [0], [0], [1], [0, 0, 1, 1], [], []>} : vector<50x500xf32>, vector<500x32xf32>, vector<50x32xf32> -> vector<50x32xf32>
    %c2 = arith.constant 2 : index
    %c0_7 = arith.constant 0 : index
    %c0_8 = arith.constant 0 : index
    %7 = vector.load %arg3[%c2, %c0_7, %c0_8] : memref<4x500x32xf32, #tpu.memory_space<vmem>>, vector<1x500x32xf32>
    %8 = vector.shape_cast %7 : vector<1x500x32xf32> to vector<500x32xf32>
    %cst_9 = arith.constant dense<0.000000e+00> : vector<50x32xf32>
    %9 = tpu.matmul %0, %8, %cst_9 {dimension_numbers = #tpu.dot_dimension_numbers<[1], [0], [0], [1], [0, 0, 1, 1], [], []>} : vector<50x500xf32>, vector<500x32xf32>, vector<50x32xf32> -> vector<50x32xf32>
    %c3 = arith.constant 3 : index
    %c0_10 = arith.constant 0 : index
    %c0_11 = arith.constant 0 : index
    %10 = vector.load %arg3[%c3, %c0_10, %c0_11] : memref<4x500x32xf32, #tpu.memory_space<vmem>>, vector<1x500x32xf32>
    %11 = vector.shape_cast %10 : vector<1x500x32xf32> to vector<500x32xf32>
    %cst_12 = arith.constant dense<0.000000e+00> : vector<50x32xf32>
    %12 = tpu.matmul %0, %11, %cst_12 {dimension_numbers = #tpu.dot_dimension_numbers<[1], [0], [0], [1], [0, 0, 1, 1], [], []>} : vector<50x500xf32>, vector<500x32xf32>, vector<50x32xf32> -> vector<50x32xf32>
    %13 = arith.maximumf %3, %6 : vector<50x32xf32>
    %14 = arith.maximumf %9, %12 : vector<50x32xf32>
    %15 = arith.maximumf %13, %14 : vector<50x32xf32>
    %c0_13 = arith.constant 0 : index
    %c0_14 = arith.constant 0 : index
    %16 = vector.load %arg2[%c0_13, %c0_14] : memref<50x1xf32, #tpu.memory_space<vmem>>, vector<50x1xf32>
    %17 = vector.broadcast %16 : vector<50x1xf32> to vector<50x32xf32>
    %18 = arith.addf %15, %17 : vector<50x32xf32>
    %c0_15 = arith.constant 0 : index
    %c0_16 = arith.constant 0 : index
    %19 = vector.load %arg4[%c0_15, %c0_16] : memref<50x32xf32, #tpu.memory_space<vmem>>, vector<50x32xf32>
    tpu.vector_store %arg4[%c0_15, %c0_16], %18 {strides = array<i32>} : memref<50x32xf32, #tpu.memory_space<vmem>>, vector<50x32xf32>,
    return
  }
  func.func @transform_0(%arg0: i32) -> (i32, i32) {
    %c0_i32 = arith.constant 0 : i32
    %c0_i32_0 = arith.constant 0 : i32
    %c0_i32_1 = arith.constant 0 : i32
    return %c0_i32, %c0_i32_0 : i32, i32
  }
  func.func @transform_1(%arg0: i32) -> (i32, i32) {
    %c0_i32 = arith.constant 0 : i32
    %c0_i32_0 = arith.constant 0 : i32
    %c0_i32_1 = arith.constant 0 : i32
    return %c0_i32, %c0_i32_0 : i32, i32
  }
  func.func @transform_2(%arg0: i32) -> (i32, i32, i32) {
    %c0_i32 = arith.constant 0 : i32
    %c0_i32_0 = arith.constant 0 : i32
    %c0_i32_1 = arith.constant 0 : i32
    return %c0_i32, %c0_i32_0, %arg0 : i32, i32, i32
  }
  func.func @transform_3(%arg0: i32) -> (i32, i32) {
    %c0_i32 = arith.constant 0 : i32
    %c0_i32_0 = arith.constant 0 : i32
    return %c0_i32, %arg0 : i32, i32
  }
}

module attributes {stable_mosaic.version = 11 : i64} {
  func.func @head_kernel(%arg0: i32, %arg1: memref<32x800xf32, #tpu.memory_space<vmem>>, %arg2: memref<32x1xf32, #tpu.memory_space<vmem>>, %arg3: memref<10x32xf32, #tpu.memory_space<vmem>>, %arg4: memref<10x1xf32, #tpu.memory_space<vmem>>, %arg5: memref<800x2xf32, #tpu.memory_space<vmem>>, %arg6: memref<10x2xf32, #tpu.memory_space<vmem>>) attributes {dimension_semantics = [#tpu.dimension_semantics<parallel>], iteration_bounds = array<i64: 1>, scalar_prefetch = 0 : i64, scratch_operands = 0 : i64, tpu.core_type = #tpu.core_type<tc>, window_params = [{pipeline_mode = #tpu.pipeline_mode<synchronous>, transform_indices = @transform_0, window_bounds = array<i64: 32, 800>}, {pipeline_mode = #tpu.pipeline_mode<synchronous>, transform_indices = @transform_1, window_bounds = array<i64: 32, 1>}, {pipeline_mode = #tpu.pipeline_mode<synchronous>, transform_indices = @transform_2, window_bounds = array<i64: 10, 32>}, {pipeline_mode = #tpu.pipeline_mode<synchronous>, transform_indices = @transform_3, window_bounds = array<i64: 10, 1>}, {transform_indices = @transform_4, window_bounds = array<i64: 800, 2>}, {transform_indices = @transform_5, window_bounds = array<i64: 10, 2>}]} {
    %c0 = arith.constant 0 : index
    %c0_0 = arith.constant 0 : index
    %0 = vector.load %arg1[%c0, %c0_0] : memref<32x800xf32, #tpu.memory_space<vmem>>, vector<32x800xf32>
    %c0_1 = arith.constant 0 : index
    %c0_2 = arith.constant 0 : index
    %1 = vector.load %arg5[%c0_1, %c0_2] : memref<800x2xf32, #tpu.memory_space<vmem>>, vector<800x2xf32>
    %cst = arith.constant dense<0.000000e+00> : vector<32x2xf32>
    %2 = tpu.matmul %0, %1, %cst {dimension_numbers = #tpu.dot_dimension_numbers<[1], [0], [0], [1], [0, 0, 1, 1], [], []>} : vector<32x800xf32>, vector<800x2xf32>, vector<32x2xf32> -> vector<32x2xf32>
    %c0_3 = arith.constant 0 : index
    %c0_4 = arith.constant 0 : index
    %3 = vector.load %arg2[%c0_3, %c0_4] : memref<32x1xf32, #tpu.memory_space<vmem>>, vector<32x1xf32>
    %4 = vector.broadcast %3 : vector<32x1xf32> to vector<32x2xf32>
    %5 = arith.addf %2, %4 : vector<32x2xf32>
    %cst_5 = arith.constant 0.000000e+00 : f32
    %6 = vector.broadcast %cst_5 : f32 to vector<32x2xf32>
    %7 = arith.maximumf %5, %6 : vector<32x2xf32>
    %c0_6 = arith.constant 0 : index
    %c0_7 = arith.constant 0 : index
    %8 = vector.load %arg3[%c0_6, %c0_7] : memref<10x32xf32, #tpu.memory_space<vmem>>, vector<10x32xf32>
    %cst_8 = arith.constant dense<0.000000e+00> : vector<10x2xf32>
    %9 = tpu.matmul %8, %7, %cst_8 {dimension_numbers = #tpu.dot_dimension_numbers<[1], [0], [0], [1], [0, 0, 1, 1], [], []>} : vector<10x32xf32>, vector<32x2xf32>, vector<10x2xf32> -> vector<10x2xf32>
    %c0_9 = arith.constant 0 : index
    %c0_10 = arith.constant 0 : index
    %10 = vector.load %arg4[%c0_9, %c0_10] : memref<10x1xf32, #tpu.memory_space<vmem>>, vector<10x1xf32>
    %11 = vector.broadcast %10 : vector<10x1xf32> to vector<10x2xf32>
    %12 = arith.addf %9, %11 : vector<10x2xf32>
    %cst_11 = arith.constant dense<0xFF800000> : vector<2xf32>
    %13 = vector.multi_reduction <maximumf>, %12, %cst_11 [0] : vector<10x2xf32> to vector<2xf32>
    %14 = vector.shape_cast %13 : vector<2xf32> to vector<1x2xf32>
    %15 = vector.broadcast %14 : vector<1x2xf32> to vector<10x2xf32>
    %16 = arith.subf %12, %15 : vector<10x2xf32>
    %17 = math.exp %16 : vector<10x2xf32>
    %cst_12 = arith.constant dense<0.000000e+00> : vector<2xf32>
    %18 = vector.multi_reduction <add>, %17, %cst_12 [0] : vector<10x2xf32> to vector<2xf32>
    %19 = vector.shape_cast %18 : vector<2xf32> to vector<1x2xf32>
    %20 = math.log %19 : vector<1x2xf32>
    %21 = vector.broadcast %20 : vector<1x2xf32> to vector<10x2xf32>
    %22 = arith.subf %16, %21 : vector<10x2xf32>
    %c0_13 = arith.constant 0 : index
    %c0_14 = arith.constant 0 : index
    %23 = vector.load %arg6[%c0_13, %c0_14] : memref<10x2xf32, #tpu.memory_space<vmem>>, vector<10x2xf32>
    tpu.vector_store %arg6[%c0_13, %c0_14], %22 {strides = array<i32>} : memref<10x2xf32, #tpu.memory_space<vmem>>, vector<10x2xf32>,
    return
  }
  func.func @transform_0(%arg0: i32) -> (i32, i32) {
    %c0_i32 = arith.constant 0 : i32
    %c0_i32_0 = arith.constant 0 : i32
    %c0_i32_1 = arith.constant 0 : i32
    return %c0_i32, %c0_i32_0 : i32, i32
  }
  func.func @transform_1(%arg0: i32) -> (i32, i32) {
    %c0_i32 = arith.constant 0 : i32
    %c0_i32_0 = arith.constant 0 : i32
    %c0_i32_1 = arith.constant 0 : i32
    return %c0_i32, %c0_i32_0 : i32, i32
  }
  func.func @transform_2(%arg0: i32) -> (i32, i32) {
    %c0_i32 = arith.constant 0 : i32
    %c0_i32_0 = arith.constant 0 : i32
    %c0_i32_1 = arith.constant 0 : i32
    return %c0_i32, %c0_i32_0 : i32, i32
  }
  func.func @transform_3(%arg0: i32) -> (i32, i32) {
    %c0_i32 = arith.constant 0 : i32
    %c0_i32_0 = arith.constant 0 : i32
    %c0_i32_1 = arith.constant 0 : i32
    return %c0_i32, %c0_i32_0 : i32, i32
  }
  func.func @transform_4(%arg0: i32) -> (i32, i32) {
    %c0_i32 = arith.constant 0 : i32
    %c0_i32_0 = arith.constant 0 : i32
    return %c0_i32, %arg0 : i32, i32
  }
  func.func @transform_5(%arg0: i32) -> (i32, i32) {
    %c0_i32 = arith.constant 0 : i32
    %c0_i32_0 = arith.constant 0 : i32
    return %c0_i32, %arg0 : i32, i32
  }
}

</mosaic_0001>

<llo_original>
// kernel: lenet_forward.3
$region0: #{lenet_forward.3}
  #allocation0 [shape = 'u32[]', space=smem, size = 0x4, offset = 0x4, fixed_abs, tag = 'smem constant byte address 0x4 - core index']
  #allocation1 [shape = 'u32[144,128]{1,0:T(1,128)}', space=vmem, size = 0x12000, scoped, tag = 'internal scratch']
  %s0 = inlined_call_operand.vmem [shape: f32[20,25], index: 0, kind: input, shape index: {}]
  %s1 = inlined_call_operand.vmem [shape: f32[20,1], index: 1, kind: input, shape index: {}]
  %s2 = inlined_call_operand.vmem [shape: f32[4,25,288], index: 2, kind: input, shape index: {}]
  %s3 = inlined_call_operand.vmem [shape: f32[20,288], index: 3, kind: output, shape index: {}]
  %s4 = sld [smem:[#allocation0]]
  $region22: #{lenet_forward.3} parent=0
    _
  %s6 = ssub.s32 1, %s4
  %s7 = scalar_select 0, %s6, %s4
  // Predicated region
  $region2: #{lenet_forward.3} parent=0 // pred_check
    _
  $region3: #{lenet_forward.3} parent=0 // pred_check_branch
    %9 = sbr.rel (0) target = $region5
  $region4: #{lenet_forward.3} parent=0 // pred_region
    _
  $region5: #{lenet_forward.3} parent=0 // pred_fallthru
    _
  // Predicated region
  $region6: #{lenet_forward.3} parent=0 // pred_check
    _
  $region7: #{lenet_forward.3} parent=0 // pred_check_branch
    %11 = sbr.rel (0) target = $region9
  $region8: #{lenet_forward.3} parent=0 // pred_region
    _
  $region9: #{lenet_forward.3} parent=0 // pred_fallthru
    _
  // Predicated region
  $region10: #{lenet_forward.3} parent=0 // pred_check
    _
  $region11: #{lenet_forward.3} parent=0 // pred_check_branch
    %13 = sbr.rel (0) target = $region13
  $region12: #{lenet_forward.3} parent=0 // pred_region
    _
  $region13: #{lenet_forward.3} parent=0 // pred_fallthru
    _
  %v14 = vld [vmem:[%s0] sm:$0xff]
  %v15 = vld [vmem:[%s0 + $0x8] sm:$0xff]
  %v16 = vld [vmem:[%s0 + $0x10] sm:$0xf]
  %v17 = vld [vmem:[%s2] sm:$0xff]
  %v18 = vld [vmem:[%s2 + $0x8] sm:$0xff]
  %v19 = vld [vmem:[%s2 + $0x10] sm:$0xff]
  %v20 = vld [vmem:[%s2 + $0x18] sm:$0xff]
  %v21 = vld [vmem:[%s2 + $0x20] sm:$0xff]
  %v22 = vld [vmem:[%s2 + $0x28] sm:$0xff]
  %v23 = vld [vmem:[%s2 + $0x30] sm:$0xff]
  %v24 = vld [vmem:[%s2 + $0x38] sm:$0xff]
  %v25 = vld [vmem:[%s2 + $0x40] sm:$0xff]
  %v26 = vld [vmem:[%s2 + $0x48] sm:$0x1]
  %v27 = vld [vmem:[%s2 + $0x50] sm:$0x1]
  %v28 = vld [vmem:[%s2 + $0x58] sm:$0x1]
  %vm29 = vcmask 203776
  %v31 = vsel %vm29, %v14, 0
  %v34 = vsel %vm29, %v15, 0
  %v37 = vsel %vm29, %v16, 0
  %vm39 = vcmask 1040384
  %v41 = vsel %vm39, %v26, 0
  %v44 = vsel %vm39, %v27, 0
  %v47 = vsel %vm39, %v28, 0
  %49 = vmatprep.subr.mxu0 %v18
  %50 = vmatpush1.msra.mxu0 %v17
  %51 = vmatprep.subr.mxu0 %v21
  %52 = vmatpush1.msra.mxu0 %v20
  %53 = vmatprep.subr.mxu0 %v24
  %54 = vmatpush1.msra.mxu0 %v23
  %55 = vmatprep.subr.mxu0 %v44
  %56 = vmatpush1.msra.mxu0 %v41
  %57 = vmatprep.subr.mxu0 0.0
  %58 = vmatpush1.msra.mxu0 0.0
  %59 = vmatprep.subr.mxu0 0.0
  %60 = vmatpush1.msra.mxu0 0.0
  %61 = vmatprep.subr.mxu0 0.0
  %62 = vmatpush1.msra.mxu0 0.0
  %63 = vmatprep.subr.mxu0 0.0
  %64 = vmatpush1.msra.mxu0 0.0
  %65 = vmatprep.subr.mxu0 0.0
  %66 = vmatpush1.msra.mxu0 0.0
  %67 = vmatprep.subr.mxu0 0.0
  %68 = vmatpush1.msra.mxu0 0.0
  %69 = vmatprep.subr.mxu0 0.0
  %70 = vmatpush1.msra.mxu0 0.0
  %71 = vmatprep.subr.mxu0 0.0
  %72 = vmatpush1.msra.mxu0 0.0
  %73 = vmatprep.subr.mxu0 0.0
  %74 = vmatpush1.msra.mxu0 0.0
  %75 = vmatprep.subr.mxu0 0.0
  %76 = vmatpush1.msra.mxu0 0.0
  %77 = vmatprep.subr.mxu0 0.0
  %78 = vmatpush1.msra.mxu0 0.0
  %79 = vmatprep.subr.mxu0 0.0
  %80 = vmatpush1.msra.mxu0 0.0
  %81 = vmatprep.subr.mxu0 0.0
  %82 = vmatpush1.msra.mxu0 0.0
  %83 = vmatprep.subr.mxu0 0.0
  %84 = vmatpush1.msra.mxu0 0.0
  %85 = vmatprep.subr.mxu0 0.0
  %86 = vmatpush1.msra.mxu0 0.0
  %87 = vmatprep.subr.mxu0 0.0
  %88 = vmatpush1.msra.mxu0 0.0
  %89 = vmatprep.subr.mxu0 0.0
  %90 = vmatpush1.msra.mxu0 0.0
  %91 = vmatprep.subr.mxu0 0.0
  %92 = vmatpush1.msra.mxu0 0.0
  %93 = vmatprep.subr.mxu0 0.0
  %94 = vmatpush1.msra.mxu0 0.0
  %95 = vmatprep.subr.mxu0 0.0
  %96 = vmatpush1.msra.mxu0 0.0
  %97 = vmatprep.subr.mxu0 0.0
  %98 = vmatpush1.msra.mxu0 0.0
  %99 = vmatprep.subr.mxu0 0.0
  %100 = vmatpush1.msra.mxu0 0.0
  %101 = vmatprep.subr.mxu0 0.0
  %102 = vmatpush1.msra.mxu0 0.0
  %103 = vmatprep.subr.mxu0 0.0
  %104 = vmatpush1.msra.mxu0 0.0
  %105 = vmatprep.subr.mxu0 0.0
  %106 = vmatpush1.msra.mxu0 0.0
  %107 = vmatprep.subr.mxu0 0.0
  %108 = vmatpush1.msra.mxu0 0.0
  %109 = vmatprep.subr.mxu0 0.0
  %110 = vmatpush1.msra.mxu0 0.0
  %111 = vmatprep.subr.mxu0 0.0
  %112 = vmatpush1.msra.mxu0 0.0
  %113 = vmatprep.mubr.f32.mxu0 0.0
  %114 = vmatmul.mubr.f32.gmra.mrb[0].mxu0 %v31
  %v115 = vpop.f32.mrb[0].mxu0
  %v116 = vadd.f32 0.0, %v115
  %v117 = vpop.f32.mrb[0].mxu0
  %v118 = vadd.f32 0.0, %v117
  %119 = vmatprep.mubr.f32.mxu0 0.0
  %120 = vmatmul.mubr.f32.gmra.mrb[0].mxu0 %v34
  %v121 = vpop.f32.mrb[0].mxu0
  %v122 = vadd.f32 0.0, %v121
  %v123 = vpop.f32.mrb[0].mxu0
  %v124 = vadd.f32 0.0, %v123
  %125 = vmatprep.mubr.f32.mxu0 0.0
  %126 = vmatmul.mubr.f32.gmra.mrb[0].mxu0 %v37
  %v127 = vpop.f32.mrb[0].mxu0
  %v128 = vadd.f32 0.0, %v127
  %v129 = vpop.f32.mrb[0].mxu0
  %v130 = vadd.f32 0.0, %v129
  %131 = vdwg.mxu0
  %132 = vmatprep.subr.mxu0 0.0
  %133 = vmatpush1.msra.mxu0 %v19
  %134 = vmatprep.subr.mxu0 0.0
  %135 = vmatpush1.msra.mxu0 %v22
  %136 = vmatprep.subr.mxu0 0.0
  %137 = vmatpush1.msra.mxu0 %v25
  %138 = vmatprep.subr.mxu0 0.0
  %139 = vmatpush1.msra.mxu0 %v47
  %140 = vmatprep.subr.mxu0 0.0
  %141 = vmatpush1.msra.mxu0 0.0
  %142 = vmatprep.subr.mxu0 0.0
  %143 = vmatpush1.msra.mxu0 0.0
  %144 = vmatprep.subr.mxu0 0.0
  %145 = vmatpush1.msra.mxu0 0.0
  %146 = vmatprep.subr.mxu0 0.0
  %147 = vmatpush1.msra.mxu0 0.0
  %148 = vmatprep.subr.mxu0 0.0
  %149 = vmatpush1.msra.mxu0 0.0
  %150 = vmatprep.subr.mxu0 0.0
  %151 = vmatpush1.msra.mxu0 0.0
  %152 = vmatprep.subr.mxu0 0.0
  %153 = vmatpush1.msra.mxu0 0.0
  %154 = vmatprep.subr.mxu0 0.0
  %155 = vmatpush1.msra.mxu0 0.0
  %156 = vmatprep.subr.mxu0 0.0
  %157 = vmatpush1.msra.mxu0 0.0
  %158 = vmatprep.subr.mxu0 0.0
  %159 = vmatpush1.msra.mxu0 0.0
  %160 = vmatprep.subr.mxu0 0.0
  %161 = vmatpush1.msra.mxu0 0.0
  %162 = vmatprep.subr.mxu0 0.0
  %163 = vmatpush1.msra.mxu0 0.0
  %164 = vmatprep.subr.mxu0 0.0
  %165 = vmatpush1.msra.mxu0 0.0
  %166 = vmatprep.subr.mxu0 0.0
  %167 = vmatpush1.msra.mxu0 0.0
  %168 = vmatprep.subr.mxu0 0.0
  %169 = vmatpush1.msra.mxu0 0.0
  %170 = vmatprep.subr.mxu0 0.0
  %171 = vmatpush1.msra.mxu0 0.0
  %172 = vmatprep.subr.mxu0 0.0
  %173 = vmatpush1.msra.mxu0 0.0
  %174 = vmatprep.subr.mxu0 0.0
  %175 = vmatpush1.msra.mxu0 0.0
  %176 = vmatprep.subr.mxu0 0.0
  %177 = vmatpush1.msra.mxu0 0.0
  %178 = vmatprep.subr.mxu0 0.0
  %179 = vmatpush1.msra.mxu0 0.0
  %180 = vmatprep.subr.mxu0 0.0
  %181 = vmatpush1.msra.mxu0 0.0
  %182 = vmatprep.subr.mxu0 0.0
  %183 = vmatpush1.msra.mxu0 0.0
  %184 = vmatprep.subr.mxu0 0.0
  %185 = vmatpush1.msra.mxu0 0.0
  %186 = vmatprep.subr.mxu0 0.0
  %187 = vmatpush1.msra.mxu0 0.0
  %188 = vmatprep.subr.mxu0 0.0
  %189 = vmatpush1.msra.mxu0 0.0
  %190 = vmatprep.subr.mxu0 0.0
  %191 = vmatpush1.msra.mxu0 0.0
  %192 = vmatprep.subr.mxu0 0.0
  %193 = vmatpush1.msra.mxu0 0.0
  %194 = vmatprep.subr.mxu0 0.0
  %195 = vmatpush1.msra.mxu0 0.0
  %196 = vmatprep.mubr.f32.mxu0 0.0
  %197 = vmatmul.mubr.f32.gmra.mrb[0].mxu0 %v31
  %v198 = vpop.f32.mrb[0].mxu0
  %v199 = vadd.f32 0.0, %v198
  %v200 = vpop.f32.mrb[0].mxu0
  %201 = vmatprep.mubr.f32.mxu0 0.0
  %202 = vmatmul.mubr.f32.gmra.mrb[0].mxu0 %v34
  %v203 = vpop.f32.mrb[0].mxu0
  %v204 = vadd.f32 0.0, %v203
  %v205 = vpop.f32.mrb[0].mxu0
  %206 = vmatprep.mubr.f32.mxu0 0.0
  %207 = vmatmul.mubr.f32.gmra.mrb[0].mxu0 %v37
  %v208 = vpop.f32.mrb[0].mxu0
  %v209 = vadd.f32 0.0, %v208
  %v210 = vpop.f32.mrb[0].mxu0
  %211 = vdwg.mxu0
  %s212 = scalar_lea.vmem %s2, 96
  %v213 = vld [vmem:[%s212] sm:$0xff]
  %v214 = vld [vmem:[%s212 + $0x8] sm:$0xff]
  %v215 = vld [vmem:[%s212 + $0x10] sm:$0xff]
  %v216 = vld [vmem:[%s212 + $0x18] sm:$0xff]
  %v217 = vld [vmem:[%s212 + $0x20] sm:$0xff]
  %v218 = vld [vmem:[%s212 + $0x28] sm:$0xff]
  %v219 = vld [vmem:[%s212 + $0x30] sm:$0xff]
  %v220 = vld [vmem:[%s212 + $0x38] sm:$0xff]
  %v221 = vld [vmem:[%s212 + $0x40] sm:$0xff]
  %v222 = vld [vmem:[%s212 + $0x48] sm:$0x1]
  %v223 = vld [vmem:[%s212 + $0x50] sm:$0x1]
  %v224 = vld [vmem:[%s212 + $0x58] sm:$0x1]
  %v226 = vsel %vm39, %v222, 0
  %v229 = vsel %vm39, %v223, 0
  %v232 = vsel %vm39, %v224, 0
  %234 = vmatprep.subr.mxu0 %v214
  %235 = vmatpush1.msra.mxu0 %v213
  %236 = vmatprep.subr.mxu0 %v217
  %237 = vmatpush1.msra.mxu0 %v216
  %238 = vmatprep.subr.mxu0 %v220
  %239 = vmatpush1.msra.mxu0 %v219
  %240 = vmatprep.subr.mxu0 %v229
  %241 = vmatpush1.msra.mxu0 %v226
  %242 = vmatprep.subr.mxu0 0.0
  %243 = vmatpush1.msra.mxu0 0.0
  %244 = vmatprep.subr.mxu0 0.0
  %245 = vmatpush1.msra.mxu0 0.0
  %246 = vmatprep.subr.mxu0 0.0
  %247 = vmatpush1.msra.mxu0 0.0
  %248 = vmatprep.subr.mxu0 0.0
  %249 = vmatpush1.msra.mxu0 0.0
  %250 = vmatprep.subr.mxu0 0.0
  %251 = vmatpush1.msra.mxu0 0.0
  %252 = vmatprep.subr.mxu0 0.0
  %253 = vmatpush1.msra.mxu0 0.0
  %254 = vmatprep.subr.mxu0 0.0
  %255 = vmatpush1.msra.mxu0 0.0
  %256 = vmatprep.subr.mxu0 0.0
  %257 = vmatpush1.msra.mxu0 0.0
  %258 = vmatprep.subr.mxu0 0.0
  %259 = vmatpush1.msra.mxu0 0.0
  %260 = vmatprep.subr.mxu0 0.0
  %261 = vmatpush1.msra.mxu0 0.0
  %262 = vmatprep.subr.mxu0 0.0
  %263 = vmatpush1.msra.mxu0 0.0
  %264 = vmatprep.subr.mxu0 0.0
  %265 = vmatpush1.msra.mxu0 0.0
  %266 = vmatprep.subr.mxu0 0.0
  %267 = vmatpush1.msra.mxu0 0.0
  %268 = vmatprep.subr.mxu0 0.0
  %269 = vmatpush1.msra.mxu0 0.0
  %270 = vmatprep.subr.mxu0 0.0
  %271 = vmatpush1.msra.mxu0 0.0
  %272 = vmatprep.subr.mxu0 0.0
  %273 = vmatpush1.msra.mxu0 0.0
  %274 = vmatprep.subr.mxu0 0.0
  %275 = vmatpush1.msra.mxu0 0.0
  %276 = vmatprep.subr.mxu0 0.0
  %277 = vmatpush1.msra.mxu0 0.0
  %278 = vmatprep.subr.mxu0 0.0
  %279 = vmatpush1.msra.mxu0 0.0
  %280 = vmatprep.subr.mxu0 0.0
  %281 = vmatpush1.msra.mxu0 0.0
  %282 = vmatprep.subr.mxu0 0.0
  %283 = vmatpush1.msra.mxu0 0.0
  %284 = vmatprep.subr.mxu0 0.0
  %285 = vmatpush1.msra.mxu0 0.0
  %286 = vmatprep.subr.mxu0 0.0
  %287 = vmatpush1.msra.mxu0 0.0
  %288 = vmatprep.subr.mxu0 0.0
  %289 = vmatpush1.msra.mxu0 0.0
  %290 = vmatprep.subr.mxu0 0.0
  %291 = vmatpush1.msra.mxu0 0.0
  %292 = vmatprep.subr.mxu0 0.0
  %293 = vmatpush1.msra.mxu0 0.0
  %294 = vmatprep.subr.mxu0 0.0
  %295 = vmatpush1.msra.mxu0 0.0
  %296 = vmatprep.subr.mxu0 0.0
  %297 = vmatpush1.msra.mxu0 0.0
  %298 = vmatprep.mubr.f32.mxu0 0.0
  %299 = vmatmul.mubr.f32.gmra.mrb[0].mxu0 %v31
  %v300 = vpop.f32.mrb[0].mxu0
  %v301 = vadd.f32 0.0, %v300
  %v302 = vpop.f32.mrb[0].mxu0
  %v303 = vadd.f32 0.0, %v302
  %304 = vmatprep.mubr.f32.mxu0 0.0
  %305 = vmatmul.mubr.f32.gmra.mrb[0].mxu0 %v34
  %v306 = vpop.f32.mrb[0].mxu0
  %v307 = vadd.f32 0.0, %v306
  %v308 = vpop.f32.mrb[0].mxu0
  %v309 = vadd.f32 0.0, %v308
  %310 = vmatprep.mubr.f32.mxu0 0.0
  %311 = vmatmul.mubr.f32.gmra.mrb[0].mxu0 %v37
  %v312 = vpop.f32.mrb[0].mxu0
  %v313 = vadd.f32 0.0, %v312
  %v314 = vpop.f32.mrb[0].mxu0
  %v315 = vadd.f32 0.0, %v314
  %316 = vdwg.mxu0
  %317 = vmatprep.subr.mxu0 0.0
  %318 = vmatpush1.msra.mxu0 %v215
  %319 = vmatprep.subr.mxu0 0.0
  %320 = vmatpush1.msra.mxu0 %v218
  %321 = vmatprep.subr.mxu0 0.0
  %322 = vmatpush1.msra.mxu0 %v221
  %323 = vmatprep.subr.mxu0 0.0
  %324 = vmatpush1.msra.mxu0 %v232
  %325 = vmatprep.subr.mxu0 0.0
  %326 = vmatpush1.msra.mxu0 0.0
  %327 = vmatprep.subr.mxu0 0.0
  %328 = vmatpush1.msra.mxu0 0.0
  %329 = vmatprep.subr.mxu0 0.0
  %330 = vmatpush1.msra.mxu0 0.0
  %331 = vmatprep.subr.mxu0 0.0
  %332 = vmatpush1.msra.mxu0 0.0
  %333 = vmatprep.subr.mxu0 0.0
  %334 = vmatpush1.msra.mxu0 0.0
  %335 = vmatprep.subr.mxu0 0.0
  %336 = vmatpush1.msra.mxu0 0.0
  %337 = vmatprep.subr.mxu0 0.0
  %338 = vmatpush1.msra.mxu0 0.0
  %339 = vmatprep.subr.mxu0 0.0
  %340 = vmatpush1.msra.mxu0 0.0
  %341 = vmatprep.subr.mxu0 0.0
  %342 = vmatpush1.msra.mxu0 0.0
  %343 = vmatprep.subr.mxu0 0.0
  %344 = vmatpush1.msra.mxu0 0.0
  %345 = vmatprep.subr.mxu0 0.0
  %346 = vmatpush1.msra.mxu0 0.0
  %347 = vmatprep.subr.mxu0 0.0
  %348 = vmatpush1.msra.mxu0 0.0
  %349 = vmatprep.subr.mxu0 0.0
  %350 = vmatpush1.msra.mxu0 0.0
  %351 = vmatprep.subr.mxu0 0.0
  %352 = vmatpush1.msra.mxu0 0.0
  %353 = vmatprep.subr.mxu0 0.0
  %354 = vmatpush1.msra.mxu0 0.0
  %355 = vmatprep.subr.mxu0 0.0
  %356 = vmatpush1.msra.mxu0 0.0
  %357 = vmatprep.subr.mxu0 0.0
  %358 = vmatpush1.msra.mxu0 0.0
  %359 = vmatprep.subr.mxu0 0.0
  %360 = vmatpush1.msra.mxu0 0.0
  %361 = vmatprep.subr.mxu0 0.0
  %362 = vmatpush1.msra.mxu0 0.0
  %363 = vmatprep.subr.mxu0 0.0
  %364 = vmatpush1.msra.mxu0 0.0
  %365 = vmatprep.subr.mxu0 0.0
  %366 = vmatpush1.msra.mxu0 0.0
  %367 = vmatprep.subr.mxu0 0.0
  %368 = vmatpush1.msra.mxu0 0.0
  %369 = vmatprep.subr.mxu0 0.0
  %370 = vmatpush1.msra.mxu0 0.0
  %371 = vmatprep.subr.mxu0 0.0
  %372 = vmatpush1.msra.mxu0 0.0
  %373 = vmatprep.subr.mxu0 0.0
  %374 = vmatpush1.msra.mxu0 0.0
  %375 = vmatprep.subr.mxu0 0.0
  %376 = vmatpush1.msra.mxu0 0.0
  %377 = vmatprep.subr.mxu0 0.0
  %378 = vmatpush1.msra.mxu0 0.0
  %379 = vmatprep.subr.mxu0 0.0
  %380 = vmatpush1.msra.mxu0 0.0
  %381 = vmatprep.mubr.f32.mxu0 0.0
  %382 = vmatmul.mubr.f32.gmra.mrb[0].mxu0 %v31
  %v383 = vpop.f32.mrb[0].mxu0
  %v384 = vadd.f32 0.0, %v383
  %v385 = vpop.f32.mrb[0].mxu0
  %386 = vmatprep.mubr.f32.mxu0 0.0
  %387 = vmatmul.mubr.f32.gmra.mrb[0].mxu0 %v34
  %v388 = vpop.f32.mrb[0].mxu0
  %v389 = vadd.f32 0.0, %v388
  %v390 = vpop.f32.mrb[0].mxu0
  %391 = vmatprep.mubr.f32.mxu0 0.0
  %392 = vmatmul.mubr.f32.gmra.mrb[0].mxu0 %v37
  %v393 = vpop.f32.mrb[0].mxu0
  %v394 = vadd.f32 0.0, %v393
  %v395 = vpop.f32.mrb[0].mxu0
  %396 = vdwg.mxu0
  %s397 = scalar_lea.vmem %s2, 192
  %v398 = vld [vmem:[%s397] sm:$0xff]
  %v399 = vld [vmem:[%s397 + $0x8] sm:$0xff]
  %v400 = vld [vmem:[%s397 + $0x10] sm:$0xff]
  %v401 = vld [vmem:[%s397 + $0x18] sm:$0xff]
  %v402 = vld [vmem:[%s397 + $0x20] sm:$0xff]
  %v403 = vld [vmem:[%s397 + $0x28] sm:$0xff]
  %v404 = vld [vmem:[%s397 + $0x30] sm:$0xff]
  %v405 = vld [vmem:[%s397 + $0x38] sm:$0xff]
  %v406 = vld [vmem:[%s397 + $0x40] sm:$0xff]
  %v407 = vld [vmem:[%s397 + $0x48] sm:$0x1]
  %v408 = vld [vmem:[%s397 + $0x50] sm:$0x1]
  %v409 = vld [vmem:[%s397 + $0x58] sm:$0x1]
  %v411 = vsel %vm39, %v407, 0
  %v414 = vsel %vm39, %v408, 0
  %v417 = vsel %vm39, %v409, 0
  %419 = vmatprep.subr.mxu0 %v399
  %420 = vmatpush1.msra.mxu0 %v398
  %421 = vmatprep.subr.mxu0 %v402
  %422 = vmatpush1.msra.mxu0 %v401
  %423 = vmatprep.subr.mxu0 %v405
  %424 = vmatpush1.msra.mxu0 %v404
  %425 = vmatprep.subr.mxu0 %v414
  %426 = vmatpush1.msra.mxu0 %v411
  %427 = vmatprep.subr.mxu0 0.0
  %428 = vmatpush1.msra.mxu0 0.0
  %429 = vmatprep.subr.mxu0 0.0
  %430 = vmatpush1.msra.mxu0 0.0
  %431 = vmatprep.subr.mxu0 0.0
  %432 = vmatpush1.msra.mxu0 0.0
  %433 = vmatprep.subr.mxu0 0.0
  %434 = vmatpush1.msra.mxu0 0.0
  %435 = vmatprep.subr.mxu0 0.0
  %436 = vmatpush1.msra.mxu0 0.0
  %437 = vmatprep.subr.mxu0 0.0
  %438 = vmatpush1.msra.mxu0 0.0
  %439 = vmatprep.subr.mxu0 0.0
  %440 = vmatpush1.msra.mxu0 0.0
  %441 = vmatprep.subr.mxu0 0.0
  %442 = vmatpush1.msra.mxu0 0.0
  %443 = vmatprep.subr.mxu0 0.0
  %444 = vmatpush1.msra.mxu0 0.0
  %445 = vmatprep.subr.mxu0 0.0
  %446 = vmatpush1.msra.mxu0 0.0
  %447 = vmatprep.subr.mxu0 0.0
  %448 = vmatpush1.msra.mxu0 0.0
  %449 = vmatprep.subr.mxu0 0.0
  %450 = vmatpush1.msra.mxu0 0.0
  %451 = vmatprep.subr.mxu0 0.0
  %452 = vmatpush1.msra.mxu0 0.0
  %453 = vmatprep.subr.mxu0 0.0
  %454 = vmatpush1.msra.mxu0 0.0
  %455 = vmatprep.subr.mxu0 0.0
  %456 = vmatpush1.msra.mxu0 0.0
  %457 = vmatprep.subr.mxu0 0.0
  %458 = vmatpush1.msra.mxu0 0.0
  %459 = vmatprep.subr.mxu0 0.0
  %460 = vmatpush1.msra.mxu0 0.0
  %461 = vmatprep.subr.mxu0 0.0
  %462 = vmatpush1.msra.mxu0 0.0
  %463 = vmatprep.subr.mxu0 0.0
  %464 = vmatpush1.msra.mxu0 0.0
  %465 = vmatprep.subr.mxu0 0.0
  %466 = vmatpush1.msra.mxu0 0.0
  %467 = vmatprep.subr.mxu0 0.0
  %468 = vmatpush1.msra.mxu0 0.0
  %469 = vmatprep.subr.mxu0 0.0
  %470 = vmatpush1.msra.mxu0 0.0
  %471 = vmatprep.subr.mxu0 0.0
  %472 = vmatpush1.msra.mxu0 0.0
  %473 = vmatprep.subr.mxu0 0.0
  %474 = vmatpush1.msra.mxu0 0.0
  %475 = vmatprep.subr.mxu0 0.0
  %476 = vmatpush1.msra.mxu0 0.0
  %477 = vmatprep.subr.mxu0 0.0
  %478 = vmatpush1.msra.mxu0 0.0
  %479 = vmatprep.subr.mxu0 0.0
  %480 = vmatpush1.msra.mxu0 0.0
  %481 = vmatprep.subr.mxu0 0.0
  %482 = vmatpush1.msra.mxu0 0.0
  %483 = vmatprep.mubr.f32.mxu0 0.0
  %484 = vmatmul.mubr.f32.gmra.mrb[0].mxu0 %v31
  %v485 = vpop.f32.mrb[0].mxu0
  %v486 = vadd.f32 0.0, %v485
  %v487 = vpop.f32.mrb[0].mxu0
  %v488 = vadd.f32 0.0, %v487
  %489 = vmatprep.mubr.f32.mxu0 0.0
  %490 = vmatmul.mubr.f32.gmra.mrb[0].mxu0 %v34
  %v491 = vpop.f32.mrb[0].mxu0
  %v492 = vadd.f32 0.0, %v491
  %v493 = vpop.f32.mrb[0].mxu0
  %v494 = vadd.f32 0.0, %v493
  %495 = vmatprep.mubr.f32.mxu0 0.0
  %496 = vmatmul.mubr.f32.gmra.mrb[0].mxu0 %v37
  %v497 = vpop.f32.mrb[0].mxu0
  %v498 = vadd.f32 0.0, %v497
  %v499 = vpop.f32.mrb[0].mxu0
  %v500 = vadd.f32 0.0, %v499
  %501 = vdwg.mxu0
  %502 = vmatprep.subr.mxu0 0.0
  %503 = vmatpush1.msra.mxu0 %v400
  %504 = vmatprep.subr.mxu0 0.0
  %505 = vmatpush1.msra.mxu0 %v403
  %506 = vmatprep.subr.mxu0 0.0
  %507 = vmatpush1.msra.mxu0 %v406
  %508 = vmatprep.subr.mxu0 0.0
  %509 = vmatpush1.msra.mxu0 %v417
  %510 = vmatprep.subr.mxu0 0.0
  %511 = vmatpush1.msra.mxu0 0.0
  %512 = vmatprep.subr.mxu0 0.0
  %513 = vmatpush1.msra.mxu0 0.0
  %514 = vmatprep.subr.mxu0 0.0
  %515 = vmatpush1.msra.mxu0 0.0
  %516 = vmatprep.subr.mxu0 0.0
  %517 = vmatpush1.msra.mxu0 0.0
  %518 = vmatprep.subr.mxu0 0.0
  %519 = vmatpush1.msra.mxu0 0.0
  %520 = vmatprep.subr.mxu0 0.0
  %521 = vmatpush1.msra.mxu0 0.0
  %522 = vmatprep.subr.mxu0 0.0
  %523 = vmatpush1.msra.mxu0 0.0
  %524 = vmatprep.subr.mxu0 0.0
  %525 = vmatpush1.msra.mxu0 0.0
  %526 = vmatprep.subr.mxu0 0.0
  %527 = vmatpush1.msra.mxu0 0.0
  %528 = vmatprep.subr.mxu0 0.0
  %529 = vmatpush1.msra.mxu0 0.0
  %530 = vmatprep.subr.mxu0 0.0
  %531 = vmatpush1.msra.mxu0 0.0
  %532 = vmatprep.subr.mxu0 0.0
  %533 = vmatpush1.msra.mxu0 0.0
  %534 = vmatprep.subr.mxu0 0.0
  %535 = vmatpush1.msra.mxu0 0.0
  %536 = vmatprep.subr.mxu0 0.0
  %537 = vmatpush1.msra.mxu0 0.0
  %538 = vmatprep.subr.mxu0 0.0
  %539 = vmatpush1.msra.mxu0 0.0
  %540 = vmatprep.subr.mxu0 0.0
  %541 = vmatpush1.msra.mxu0 0.0
  %542 = vmatprep.subr.mxu0 0.0
  %543 = vmatpush1.msra.mxu0 0.0
  %544 = vmatprep.subr.mxu0 0.0
  %545 = vmatpush1.msra.mxu0 0.0
  %546 = vmatprep.subr.mxu0 0.0
  %547 = vmatpush1.msra.mxu0 0.0
  %548 = vmatprep.subr.mxu0 0.0
  %549 = vmatpush1.msra.mxu0 0.0
  %550 = vmatprep.subr.mxu0 0.0
  %551 = vmatpush1.msra.mxu0 0.0
  %552 = vmatprep.subr.mxu0 0.0
  %553 = vmatpush1.msra.mxu0 0.0
  %554 = vmatprep.subr.mxu0 0.0
  %555 = vmatpush1.msra.mxu0 0.0
  %556 = vmatprep.subr.mxu0 0.0
  %557 = vmatpush1.msra.mxu0 0.0
  %558 = vmatprep.subr.mxu0 0.0
  %559 = vmatpush1.msra.mxu0 0.0
  %560 = vmatprep.subr.mxu0 0.0
  %561 = vmatpush1.msra.mxu0 0.0
  %562 = vmatprep.subr.mxu0 0.0
  %563 = vmatpush1.msra.mxu0 0.0
  %564 = vmatprep.subr.mxu0 0.0
  %565 = vmatpush1.msra.mxu0 0.0
  %566 = vmatprep.mubr.f32.mxu0 0.0
  %567 = vmatmul.mubr.f32.gmra.mrb[0].mxu0 %v31
  %v568 = vpop.f32.mrb[0].mxu0
  %v569 = vadd.f32 0.0, %v568
  %v570 = vpop.f32.mrb[0].mxu0
  %571 = vmatprep.mubr.f32.mxu0 0.0
  %572 = vmatmul.mubr.f32.gmra.mrb[0].mxu0 %v34
  %v573 = vpop.f32.mrb[0].mxu0
  %v574 = vadd.f32 0.0, %v573
  %v575 = vpop.f32.mrb[0].mxu0
  %576 = vmatprep.mubr.f32.mxu0 0.0
  %577 = vmatmul.mubr.f32.gmra.mrb[0].mxu0 %v37
  %v578 = vpop.f32.mrb[0].mxu0
  %v579 = vadd.f32 0.0, %v578
  %v580 = vpop.f32.mrb[0].mxu0
  %581 = vdwg.mxu0
  %s582 = scalar_lea.vmem %s2, 288
  %v583 = vld [vmem:[%s582] sm:$0xff]
  %v584 = vld [vmem:[%s582 + $0x8] sm:$0xff]
  %v585 = vld [vmem:[%s582 + $0x10] sm:$0xff]
  %v586 = vld [vmem:[%s582 + $0x18] sm:$0xff]
  %v587 = vld [vmem:[%s582 + $0x20] sm:$0xff]
  %v588 = vld [vmem:[%s582 + $0x28] sm:$0xff]
  %v589 = vld [vmem:[%s582 + $0x30] sm:$0xff]
  %v590 = vld [vmem:[%s582 + $0x38] sm:$0xff]
  %v591 = vld [vmem:[%s582 + $0x40] sm:$0xff]
  %v592 = vld [vmem:[%s582 + $0x48] sm:$0x1]
  %v593 = vld [vmem:[%s582 + $0x50] sm:$0x1]
  %v594 = vld [vmem:[%s582 + $0x58] sm:$0x1]
  %v596 = vsel %vm39, %v592, 0
  %v599 = vsel %vm39, %v593, 0
  %v602 = vsel %vm39, %v594, 0
  %604 = vmatprep.subr.mxu0 %v584
  %605 = vmatpush1.msra.mxu0 %v583
  %606 = vmatprep.subr.mxu0 %v587
  %607 = vmatpush1.msra.mxu0 %v586
  %608 = vmatprep.subr.mxu0 %v590
  %609 = vmatpush1.msra.mxu0 %v589
  %610 = vmatprep.subr.mxu0 %v599
  %611 = vmatpush1.msra.mxu0 %v596
  %612 = vmatprep.subr.mxu0 0.0
  %613 = vmatpush1.msra.mxu0 0.0
  %614 = vmatprep.subr.mxu0 0.0
  %615 = vmatpush1.msra.mxu0 0.0
  %616 = vmatprep.subr.mxu0 0.0
  %617 = vmatpush1.msra.mxu0 0.0
  %618 = vmatprep.subr.mxu0 0.0
  %619 = vmatpush1.msra.mxu0 0.0
  %620 = vmatprep.subr.mxu0 0.0
  %621 = vmatpush1.msra.mxu0 0.0
  %622 = vmatprep.subr.mxu0 0.0
  %623 = vmatpush1.msra.mxu0 0.0
  %624 = vmatprep.subr.mxu0 0.0
  %625 = vmatpush1.msra.mxu0 0.0
  %626 = vmatprep.subr.mxu0 0.0
  %627 = vmatpush1.msra.mxu0 0.0
  %628 = vmatprep.subr.mxu0 0.0
  %629 = vmatpush1.msra.mxu0 0.0
  %630 = vmatprep.subr.mxu0 0.0
  %631 = vmatpush1.msra.mxu0 0.0
  %632 = vmatprep.subr.mxu0 0.0
  %633 = vmatpush1.msra.mxu0 0.0
  %634 = vmatprep.subr.mxu0 0.0
  %635 = vmatpush1.msra.mxu0 0.0
  %636 = vmatprep.subr.mxu0 0.0
  %637 = vmatpush1.msra.mxu0 0.0
  %638 = vmatprep.subr.mxu0 0.0
  %639 = vmatpush1.msra.mxu0 0.0
  %640 = vmatprep.subr.mxu0 0.0
  %641 = vmatpush1.msra.mxu0 0.0
  %642 = vmatprep.subr.mxu0 0.0
  %643 = vmatpush1.msra.mxu0 0.0
  %644 = vmatprep.subr.mxu0 0.0
  %645 = vmatpush1.msra.mxu0 0.0
  %646 = vmatprep.subr.mxu0 0.0
  %647 = vmatpush1.msra.mxu0 0.0
  %648 = vmatprep.subr.mxu0 0.0
  %649 = vmatpush1.msra.mxu0 0.0
  %650 = vmatprep.subr.mxu0 0.0
  %651 = vmatpush1.msra.mxu0 0.0
  %652 = vmatprep.subr.mxu0 0.0
  %653 = vmatpush1.msra.mxu0 0.0
  %654 = vmatprep.subr.mxu0 0.0
  %655 = vmatpush1.msra.mxu0 0.0
  %656 = vmatprep.subr.mxu0 0.0
  %657 = vmatpush1.msra.mxu0 0.0
  %658 = vmatprep.subr.mxu0 0.0
  %659 = vmatpush1.msra.mxu0 0.0
  %660 = vmatprep.subr.mxu0 0.0
  %661 = vmatpush1.msra.mxu0 0.0
  %662 = vmatprep.subr.mxu0 0.0
  %663 = vmatpush1.msra.mxu0 0.0
  %664 = vmatprep.subr.mxu0 0.0
  %665 = vmatpush1.msra.mxu0 0.0
  %666 = vmatprep.subr.mxu0 0.0
  %667 = vmatpush1.msra.mxu0 0.0
  %668 = vmatprep.mubr.f32.mxu0 0.0
  %669 = vmatmul.mubr.f32.gmra.mrb[0].mxu0 %v31
  %v670 = vpop.f32.mrb[0].mxu0
  %v671 = vadd.f32 0.0, %v670
  %v672 = vpop.f32.mrb[0].mxu0
  %v673 = vadd.f32 0.0, %v672
  %674 = vmatprep.mubr.f32.mxu0 0.0
  %675 = vmatmul.mubr.f32.gmra.mrb[0].mxu0 %v34
  %v676 = vpop.f32.mrb[0].mxu0
  %v677 = vadd.f32 0.0, %v676
  %v678 = vpop.f32.mrb[0].mxu0
  %v679 = vadd.f32 0.0, %v678
  %680 = vmatprep.mubr.f32.mxu0 0.0
  %681 = vmatmul.mubr.f32.gmra.mrb[0].mxu0 %v37
  %v682 = vpop.f32.mrb[0].mxu0
  %v683 = vadd.f32 0.0, %v682
  %v684 = vpop.f32.mrb[0].mxu0
  %v685 = vadd.f32 0.0, %v684
  %686 = vdwg.mxu0
  %687 = vmatprep.subr.mxu0 0.0
  %688 = vmatpush1.msra.mxu0 %v585
  %689 = vmatprep.subr.mxu0 0.0
  %690 = vmatpush1.msra.mxu0 %v588
  %691 = vmatprep.subr.mxu0 0.0
  %692 = vmatpush1.msra.mxu0 %v591
  %693 = vmatprep.subr.mxu0 0.0
  %694 = vmatpush1.msra.mxu0 %v602
  %695 = vmatprep.subr.mxu0 0.0
  %696 = vmatpush1.msra.mxu0 0.0
  %697 = vmatprep.subr.mxu0 0.0
  %698 = vmatpush1.msra.mxu0 0.0
  %699 = vmatprep.subr.mxu0 0.0
  %700 = vmatpush1.msra.mxu0 0.0
  %701 = vmatprep.subr.mxu0 0.0
  %702 = vmatpush1.msra.mxu0 0.0
  %703 = vmatprep.subr.mxu0 0.0
  %704 = vmatpush1.msra.mxu0 0.0
  %705 = vmatprep.subr.mxu0 0.0
  %706 = vmatpush1.msra.mxu0 0.0
  %707 = vmatprep.subr.mxu0 0.0
  %708 = vmatpush1.msra.mxu0 0.0
  %709 = vmatprep.subr.mxu0 0.0
  %710 = vmatpush1.msra.mxu0 0.0
  %711 = vmatprep.subr.mxu0 0.0
  %712 = vmatpush1.msra.mxu0 0.0
  %713 = vmatprep.subr.mxu0 0.0
  %714 = vmatpush1.msra.mxu0 0.0
  %715 = vmatprep.subr.mxu0 0.0
  %716 = vmatpush1.msra.mxu0 0.0
  %717 = vmatprep.subr.mxu0 0.0
  %718 = vmatpush1.msra.mxu0 0.0
  %719 = vmatprep.subr.mxu0 0.0
  %720 = vmatpush1.msra.mxu0 0.0
  %721 = vmatprep.subr.mxu0 0.0
  %722 = vmatpush1.msra.mxu0 0.0
  %723 = vmatprep.subr.mxu0 0.0
  %724 = vmatpush1.msra.mxu0 0.0
  %725 = vmatprep.subr.mxu0 0.0
  %726 = vmatpush1.msra.mxu0 0.0
  %727 = vmatprep.subr.mxu0 0.0
  %728 = vmatpush1.msra.mxu0 0.0
  %729 = vmatprep.subr.mxu0 0.0
  %730 = vmatpush1.msra.mxu0 0.0
  %731 = vmatprep.subr.mxu0 0.0
  %732 = vmatpush1.msra.mxu0 0.0
  %733 = vmatprep.subr.mxu0 0.0
  %734 = vmatpush1.msra.mxu0 0.0
  %735 = vmatprep.subr.mxu0 0.0
  %736 = vmatpush1.msra.mxu0 0.0
  %737 = vmatprep.subr.mxu0 0.0
  %738 = vmatpush1.msra.mxu0 0.0
  %739 = vmatprep.subr.mxu0 0.0
  %740 = vmatpush1.msra.mxu0 0.0
  %741 = vmatprep.subr.mxu0 0.0
  %742 = vmatpush1.msra.mxu0 0.0
  %743 = vmatprep.subr.mxu0 0.0
  %744 = vmatpush1.msra.mxu0 0.0
  %745 = vmatprep.subr.mxu0 0.0
  %746 = vmatpush1.msra.mxu0 0.0
  %747 = vmatprep.subr.mxu0 0.0
  %748 = vmatpush1.msra.mxu0 0.0
  %749 = vmatprep.subr.mxu0 0.0
  %750 = vmatpush1.msra.mxu0 0.0
  %751 = vmatprep.mubr.f32.mxu0 0.0
  %752 = vmatmul.mubr.f32.gmra.mrb[0].mxu0 %v31
  %v753 = vpop.f32.mrb[0].mxu0
  %v754 = vadd.f32 0.0, %v753
  %v755 = vpop.f32.mrb[0].mxu0
  %756 = vmatprep.mubr.f32.mxu0 0.0
  %757 = vmatmul.mubr.f32.gmra.mrb[0].mxu0 %v34
  %v758 = vpop.f32.mrb[0].mxu0
  %v759 = vadd.f32 0.0, %v758
  %v760 = vpop.f32.mrb[0].mxu0
  %761 = vmatprep.mubr.f32.mxu0 0.0
  %762 = vmatmul.mubr.f32.gmra.mrb[0].mxu0 %v37
  %v763 = vpop.f32.mrb[0].mxu0
  %v764 = vadd.f32 0.0, %v763
  %v765 = vpop.f32.mrb[0].mxu0
  %766 = vdwg.mxu0
  %v767 = vmax.f32 %v116, %v301
  %v768 = vmax.f32 %v118, %v303
  %v769 = vmax.f32 %v199, %v384
  %v770 = vmax.f32 %v122, %v307
  %v771 = vmax.f32 %v124, %v309
  %v772 = vmax.f32 %v204, %v389
  %v773 = vmax.f32 %v128, %v313
  %v774 = vmax.f32 %v130, %v315
  %v775 = vmax.f32 %v209, %v394
  %v776 = vmax.f32 %v486, %v671
  %v777 = vmax.f32 %v488, %v673
  %v778 = vmax.f32 %v569, %v754
  %v779 = vmax.f32 %v492, %v677
  %v780 = vmax.f32 %v494, %v679
  %v781 = vmax.f32 %v574, %v759
  %v782 = vmax.f32 %v498, %v683
  %v783 = vmax.f32 %v500, %v685
  %v784 = vmax.f32 %v579, %v764
  %v785 = vmax.f32 %v767, %v776
  %v786 = vmax.f32 %v768, %v777
  %v787 = vmax.f32 %v769, %v778
  %v788 = vmax.f32 %v770, %v779
  %v789 = vmax.f32 %v771, %v780
  %v790 = vmax.f32 %v772, %v781
  %v791 = vmax.f32 %v773, %v782
  %v792 = vmax.f32 %v774, %v783
  %v793 = vmax.f32 %v775, %v784
  %v794 = vld [vmem:[%s1] sm:$0xff]
  %v795 = vld [vmem:[%s1 + $0x8] sm:$0xff]
  %v796 = vld [vmem:[%s1 + $0x10] sm:$0xf]
  %798 = vset.pattern.permute.xlu0 0
  %799 = vperm.xlu0 %798, %v794
  %v800 = vpop.permute.xlu0 %799
  %803 = vset.pattern.permute.xlu0 0
  %804 = vperm.xlu0 %803, %v795
  %v805 = vpop.permute.xlu0 %804
  %808 = vset.pattern.permute.xlu0 0
  %809 = vperm.xlu0 %808, %v796
  %v810 = vpop.permute.xlu0 %809
  %v812 = vadd.f32 %v785, %v800
  %v813 = vadd.f32 %v786, %v800
  %v814 = vadd.f32 %v787, %v800
  %v815 = vadd.f32 %v788, %v805
  %v816 = vadd.f32 %v789, %v805
  %v817 = vadd.f32 %v790, %v805
  %v818 = vadd.f32 %v791, %v810
  %v819 = vadd.f32 %v792, %v810
  %v820 = vadd.f32 %v793, %v810
  %821 = vst [vmem:[%s3] sm:$0xff] %v812
  %822 = vst [vmem:[%s3 + $0x8] sm:$0xff] %v813
  %vm823 = vcmask 261120
  %824 = vst.msk [vmem:[%s3 + $0x10] sm:$0xff] %vm823, %v814
  %825 = vst [vmem:[%s3 + $0x18] sm:$0xff] %v815
  %826 = vst [vmem:[%s3 + $0x20] sm:$0xff] %v816
  %827 = vst.msk [vmem:[%s3 + $0x28] sm:$0xff] %vm823, %v817
  %828 = vst [vmem:[%s3 + $0x30] sm:$0xf] %v818
  %829 = vst [vmem:[%s3 + $0x38] sm:$0xf] %v819
  %vm830 = vcmask 257024
  %831 = vst.msk [vmem:[%s3 + $0x40] sm:$0xf] %vm830, %v820
  // Predicated region
  $region14: #{lenet_forward.3} parent=0 // pred_check
    _
  $region15: #{lenet_forward.3} parent=0 // pred_check_branch
    %833 = sbr.rel (0) target = $region17
  $region16: #{lenet_forward.3} parent=0 // pred_region
    _
  $region17: #{lenet_forward.3} parent=0 // pred_fallthru
    _
  // Predicated region
  $region18: #{lenet_forward.3} parent=0 // pred_check
    _
  $region19: #{lenet_forward.3} parent=0 // pred_check_branch
    %835 = sbr.rel (0) target = $region21
  $region20: #{lenet_forward.3} parent=0 // pred_region
    _
  $region21: #{lenet_forward.3} parent=0 // pred_fallthru
    _

// kernel: lenet_forward.4
$region0: #{lenet_forward.4}
  #allocation0 [shape = 'u32[]', space=smem, size = 0x4, offset = 0x4, fixed_abs, tag = 'smem constant byte address 0x4 - core index']
  #allocation1 [shape = 'u32[144,128]{1,0:T(1,128)}', space=vmem, size = 0x12000, scoped, tag = 'internal scratch']
  %s0 = inlined_call_operand.vmem [shape: f32[50,500], index: 0, kind: input, shape index: {}]
  %s1 = inlined_call_operand.vmem [shape: f32[50,1], index: 1, kind: input, shape index: {}]
  %s2 = inlined_call_operand.vmem [shape: f32[4,500,32], index: 2, kind: input, shape index: {}]
  %s3 = inlined_call_operand.vmem [shape: f32[50,32], index: 3, kind: output, shape index: {}]
  %s4 = sld [smem:[#allocation0]]
  $region22: #{lenet_forward.4} parent=0
    _
  %s6 = ssub.s32 1, %s4
  %s7 = scalar_select 0, %s6, %s4
  // Predicated region
  $region2: #{lenet_forward.4} parent=0 // pred_check
    _
  $region3: #{lenet_forward.4} parent=0 // pred_check_branch
    %9 = sbr.rel (0) target = $region5
  $region4: #{lenet_forward.4} parent=0 // pred_region
    _
  $region5: #{lenet_forward.4} parent=0 // pred_fallthru
    _
  // Predicated region
  $region6: #{lenet_forward.4} parent=0 // pred_check
    _
  $region7: #{lenet_forward.4} parent=0 // pred_check_branch
    %11 = sbr.rel (0) target = $region9
  $region8: #{lenet_forward.4} parent=0 // pred_region
    _
  $region9: #{lenet_forward.4} parent=0 // pred_fallthru
    _
  // Predicated region
  $region10: #{lenet_forward.4} parent=0 // pred_check
    _
  $region11: #{lenet_forward.4} parent=0 // pred_check_branch
    %13 = sbr.rel (0) target = $region13
  $region12: #{lenet_forward.4} parent=0 // pred_region
    _
  $region13: #{lenet_forward.4} parent=0 // pred_fallthru
    _
  %v14 = vld [vmem:[%s0] sm:$0xff]
  %v15 = vld [vmem:[%s0 + $0x8] sm:$0xff]
  %v16 = vld [vmem:[%s0 + $0x10] sm:$0xff]
  %v17 = vld [vmem:[%s0 + $0x18] sm:$0xff]
  %v18 = vld [vmem:[%s0 + $0x20] sm:$0xff]
  %v19 = vld [vmem:[%s0 + $0x28] sm:$0xff]
  %v20 = vld [vmem:[%s0 + $0x30] sm:$0xff]
  %v21 = vld [vmem:[%s0 + $0x38] sm:$0xff]
  %v22 = vld [vmem:[%s0 + $0x40] sm:$0xff]
  %v23 = vld [vmem:[%s0 + $0x48] sm:$0xff]
  %v24 = vld [vmem:[%s0 + $0x50] sm:$0xff]
  %v25 = vld [vmem:[%s0 + $0x58] sm:$0xff]
  %v26 = vld [vmem:[%s0 + $0x60] sm:$0xff]
  %v27 = vld [vmem:[%s0 + $0x68] sm:$0xff]
  %v28 = vld [vmem:[%s0 + $0x70] sm:$0xff]
  %v29 = vld [vmem:[%s0 + $0x78] sm:$0xff]
  %v30 = vld [vmem:[%s0 + $0x80] sm:$0xff]
  %v31 = vld [vmem:[%s0 + $0x88] sm:$0xff]
  %v32 = vld [vmem:[%s0 + $0x90] sm:$0xff]
  %v33 = vld [vmem:[%s0 + $0x98] sm:$0xff]
  %v34 = vld [vmem:[%s0 + $0xa0] sm:$0xff]
  %v35 = vld [vmem:[%s0 + $0xa8] sm:$0xff]
  %v36 = vld [vmem:[%s0 + $0xb0] sm:$0xff]
  %v37 = vld [vmem:[%s0 + $0xb8] sm:$0xff]
  %v38 = vld [vmem:[%s0 + $0xc0] sm:$0x3]
  %v39 = vld [vmem:[%s0 + $0xc8] sm:$0x3]
  %v40 = vld [vmem:[%s0 + $0xd0] sm:$0x3]
  %v41 = vld [vmem:[%s0 + $0xd8] sm:$0x3]
  %v42 = vld [vmem:[%s2] sm:$0xff]
  %v43 = vld [vmem:[%s2 + $0x8] sm:$0xff]
  %v44 = vld [vmem:[%s2 + $0x10] sm:$0xff]
  %v45 = vld [vmem:[%s2 + $0x18] sm:$0xff]
  %v46 = vld [vmem:[%s2 + $0x20] sm:$0xff]
  %v47 = vld [vmem:[%s2 + $0x28] sm:$0xff]
  %v48 = vld [vmem:[%s2 + $0x30] sm:$0xff]
  %v49 = vld [vmem:[%s2 + $0x38] sm:$0xff]
  %v50 = vld [vmem:[%s2 + $0x40] sm:$0xff]
  %v51 = vld [vmem:[%s2 + $0x48] sm:$0xff]
  %v52 = vld [vmem:[%s2 + $0x50] sm:$0xff]
  %v53 = vld [vmem:[%s2 + $0x58] sm:$0xff]
  %v54 = vld [vmem:[%s2 + $0x60] sm:$0xff]
  %v55 = vld [vmem:[%s2 + $0x68] sm:$0xff]
  %v56 = vld [vmem:[%s2 + $0x70] sm:$0xff]
  %v57 = vld [vmem:[%s2 + $0x78] sm:$0xff]
  %v58 = vld [vmem:[%s2 + $0x80] sm:$0xff]
  %v59 = vld [vmem:[%s2 + $0x88] sm:$0xff]
  %v60 = vld [vmem:[%s2 + $0x90] sm:$0xff]
  %v61 = vld [vmem:[%s2 + $0x98] sm:$0xff]
  %v62 = vld [vmem:[%s2 + $0xa0] sm:$0xff]
  %v63 = vld [vmem:[%s2 + $0xa8] sm:$0xff]
  %v64 = vld [vmem:[%s2 + $0xb0] sm:$0xff]
  %v65 = vld [vmem:[%s2 + $0xb8] sm:$0xff]
  %v66 = vld [vmem:[%s2 + $0xc0] sm:$0xff]
  %v67 = vld [vmem:[%s2 + $0xc8] sm:$0xff]
  %v68 = vld [vmem:[%s2 + $0xd0] sm:$0xff]
  %v69 = vld [vmem:[%s2 + $0xd8] sm:$0xff]
  %v70 = vld [vmem:[%s2 + $0xe0] sm:$0xff]
  %v71 = vld [vmem:[%s2 + $0xe8] sm:$0xff]
  %v72 = vld [vmem:[%s2 + $0xf0] sm:$0xff]
  %v73 = vld [vmem:[%s2 + $0xf8] sm:$0xff]
  %v74 = vld [vmem:[%s2 + $0x100] sm:$0xff]
  %v75 = vld [vmem:[%s2 + $0x108] sm:$0xff]
  %v76 = vld [vmem:[%s2 + $0x110] sm:$0xff]
  %v77 = vld [vmem:[%s2 + $0x118] sm:$0xff]
  %v78 = vld [vmem:[%s2 + $0x120] sm:$0xff]
  %v79 = vld [vmem:[%s2 + $0x128] sm:$0xff]
  %v80 = vld [vmem:[%s2 + $0x130] sm:$0xff]
  %v81 = vld [vmem:[%s2 + $0x138] sm:$0xff]
  %v82 = vld [vmem:[%s2 + $0x140] sm:$0xff]
  %v83 = vld [vmem:[%s2 + $0x148] sm:$0xff]
  %v84 = vld [vmem:[%s2 + $0x150] sm:$0xff]
  %v85 = vld [vmem:[%s2 + $0x158] sm:$0xff]
  %v86 = vld [vmem:[%s2 + $0x160] sm:$0xff]
  %v87 = vld [vmem:[%s2 + $0x168] sm:$0xff]
  %v88 = vld [vmem:[%s2 + $0x170] sm:$0xff]
  %v89 = vld [vmem:[%s2 + $0x178] sm:$0xff]
  %v90 = vld [vmem:[%s2 + $0x180] sm:$0xff]
  %v91 = vld [vmem:[%s2 + $0x188] sm:$0xff]
  %v92 = vld [vmem:[%s2 + $0x190] sm:$0xff]
  %v93 = vld [vmem:[%s2 + $0x198] sm:$0xff]
  %v94 = vld [vmem:[%s2 + $0x1a0] sm:$0xff]
  %v95 = vld [vmem:[%s2 + $0x1a8] sm:$0xff]
  %v96 = vld [vmem:[%s2 + $0x1b0] sm:$0xff]
  %v97 = vld [vmem:[%s2 + $0x1b8] sm:$0xff]
  %v98 = vld [vmem:[%s2 + $0x1c0] sm:$0xff]
  %v99 = vld [vmem:[%s2 + $0x1c8] sm:$0xff]
  %v100 = vld [vmem:[%s2 + $0x1d0] sm:$0xff]
  %v101 = vld [vmem:[%s2 + $0x1d8] sm:$0xff]
  %v102 = vld [vmem:[%s2 + $0x1e0] sm:$0xff]
  %v103 = vld [vmem:[%s2 + $0x1e8] sm:$0xff]
  %v104 = vld [vmem:[%s2 + $0x1f0] sm:$0xf]
  %vm105 = vcmask 949248
  %v107 = vsel %vm105, %v17, 0
  %v110 = vsel %vm105, %v21, 0
  %v113 = vsel %vm105, %v25, 0
  %v116 = vsel %vm105, %v29, 0
  %v119 = vsel %vm105, %v33, 0
  %v122 = vsel %vm105, %v37, 0
  %v125 = vsel %vm105, %v41, 0
  %vm127 = vcmask 1043456
  %v129 = vsel %vm127, %v104, 0
  %131 = vmatprep.subr.mxu0 0.0
  %132 = vmatpush1.msra.mxu0 %v42
  %133 = vmatprep.subr.mxu0 0.0
  %134 = vmatpush1.msra.mxu0 %v43
  %135 = vmatprep.subr.mxu0 0.0
  %136 = vmatpush1.msra.mxu0 %v44
  %137 = vmatprep.subr.mxu0 0.0
  %138 = vmatpush1.msra.mxu0 %v45
  %139 = vmatprep.subr.mxu0 0.0
  %140 = vmatpush1.msra.mxu0 %v46
  %141 = vmatprep.subr.mxu0 0.0
  %142 = vmatpush1.msra.mxu0 %v47
  %143 = vmatprep.subr.mxu0 0.0
  %144 = vmatpush1.msra.mxu0 %v48
  %145 = vmatprep.subr.mxu0 0.0
  %146 = vmatpush1.msra.mxu0 %v49
  %147 = vmatprep.subr.mxu0 0.0
  %148 = vmatpush1.msra.mxu0 %v50
  %149 = vmatprep.subr.mxu0 0.0
  %150 = vmatpush1.msra.mxu0 %v51
  %151 = vmatprep.subr.mxu0 0.0
  %152 = vmatpush1.msra.mxu0 %v52
  %153 = vmatprep.subr.mxu0 0.0
  %154 = vmatpush1.msra.mxu0 %v53
  %155 = vmatprep.subr.mxu0 0.0
  %156 = vmatpush1.msra.mxu0 %v54
  %157 = vmatprep.subr.mxu0 0.0
  %158 = vmatpush1.msra.mxu0 %v55
  %159 = vmatprep.subr.mxu0 0.0
  %160 = vmatpush1.msra.mxu0 %v56
  %161 = vmatprep.subr.mxu0 0.0
  %162 = vmatpush1.msra.mxu0 %v57
  %163 = vmatprep.subr.mxu0 0.0
  %164 = vmatpush1.msra.mxu0 %v58
  %165 = vmatprep.subr.mxu0 0.0
  %166 = vmatpush1.msra.mxu0 %v59
  %167 = vmatprep.subr.mxu0 0.0
  %168 = vmatpush1.msra.mxu0 %v60
  %169 = vmatprep.subr.mxu0 0.0
  %170 = vmatpush1.msra.mxu0 %v61
  %171 = vmatprep.subr.mxu0 0.0
  %172 = vmatpush1.msra.mxu0 %v62
  %173 = vmatprep.subr.mxu0 0.0
  %174 = vmatpush1.msra.mxu0 %v63
  %175 = vmatprep.subr.mxu0 0.0
  %176 = vmatpush1.msra.mxu0 %v64
  %177 = vmatprep.subr.mxu0 0.0
  %178 = vmatpush1.msra.mxu0 %v65
  %179 = vmatprep.subr.mxu0 0.0
  %180 = vmatpush1.msra.mxu0 %v66
  %181 = vmatprep.subr.mxu0 0.0
  %182 = vmatpush1.msra.mxu0 %v67
  %183 = vmatprep.subr.mxu0 0.0
  %184 = vmatpush1.msra.mxu0 %v68
  %185 = vmatprep.subr.mxu0 0.0
  %186 = vmatpush1.msra.mxu0 %v69
  %187 = vmatprep.subr.mxu0 0.0
  %188 = vmatpush1.msra.mxu0 %v70
  %189 = vmatprep.subr.mxu0 0.0
  %190 = vmatpush1.msra.mxu0 %v71
  %191 = vmatprep.subr.mxu0 0.0
  %192 = vmatpush1.msra.mxu0 %v72
  %193 = vmatprep.subr.mxu0 0.0
  %194 = vmatpush1.msra.mxu0 %v73
  %195 = vmatprep.mubr.f32.mxu0 %v15
  %196 = vmatmul.mubr.f32.gmra.mrb[0].mxu0 %v14
  %v197 = vpop.f32.mrb[0].mxu0
  %v198 = vadd.f32 0.0, %v197
  %v199 = vpop.f32.mrb[0].mxu0
  %200 = vmatprep.mubr.f32.mxu0 %v19
  %201 = vmatmul.mubr.f32.gmra.mrb[0].mxu0 %v18
  %v202 = vpop.f32.mrb[0].mxu0
  %v203 = vadd.f32 0.0, %v202
  %v204 = vpop.f32.mrb[0].mxu0
  %205 = vmatprep.mubr.f32.mxu0 %v23
  %206 = vmatmul.mubr.f32.gmra.mrb[0].mxu0 %v22
  %v207 = vpop.f32.mrb[0].mxu0
  %v208 = vadd.f32 0.0, %v207
  %v209 = vpop.f32.mrb[0].mxu0
  %210 = vmatprep.mubr.f32.mxu0 %v27
  %211 = vmatmul.mubr.f32.gmra.mrb[0].mxu0 %v26
  %v212 = vpop.f32.mrb[0].mxu0
  %v213 = vadd.f32 0.0, %v212
  %v214 = vpop.f32.mrb[0].mxu0
  %215 = vmatprep.mubr.f32.mxu0 %v31
  %216 = vmatmul.mubr.f32.gmra.mrb[0].mxu0 %v30
  %v217 = vpop.f32.mrb[0].mxu0
  %v218 = vadd.f32 0.0, %v217
  %v219 = vpop.f32.mrb[0].mxu0
  %220 = vmatprep.mubr.f32.mxu0 %v35
  %221 = vmatmul.mubr.f32.gmra.mrb[0].mxu0 %v34
  %v222 = vpop.f32.mrb[0].mxu0
  %v223 = vadd.f32 0.0, %v222
  %v224 = vpop.f32.mrb[0].mxu0
  %225 = vmatprep.mubr.f32.mxu0 %v39
  %226 = vmatmul.mubr.f32.gmra.mrb[0].mxu0 %v38
  %v227 = vpop.f32.mrb[0].mxu0
  %v228 = vadd.f32 0.0, %v227
  %v229 = vpop.f32.mrb[0].mxu0
  %230 = vdwg.mxu0
  %231 = vmatprep.subr.mxu0 0.0
  %232 = vmatpush1.msra.mxu0 %v74
  %233 = vmatprep.subr.mxu0 0.0
  %234 = vmatpush1.msra.mxu0 %v75
  %235 = vmatprep.subr.mxu0 0.0
  %236 = vmatpush1.msra.mxu0 %v76
  %237 = vmatprep.subr.mxu0 0.0
  %238 = vmatpush1.msra.mxu0 %v77
  %239 = vmatprep.subr.mxu0 0.0
  %240 = vmatpush1.msra.mxu0 %v78
  %241 = vmatprep.subr.mxu0 0.0
  %242 = vmatpush1.msra.mxu0 %v79
  %243 = vmatprep.subr.mxu0 0.0
  %244 = vmatpush1.msra.mxu0 %v80
  %245 = vmatprep.subr.mxu0 0.0
  %246 = vmatpush1.msra.mxu0 %v81
  %247 = vmatprep.subr.mxu0 0.0
  %248 = vmatpush1.msra.mxu0 %v82
  %249 = vmatprep.subr.mxu0 0.0
  %250 = vmatpush1.msra.mxu0 %v83
  %251 = vmatprep.subr.mxu0 0.0
  %252 = vmatpush1.msra.mxu0 %v84
  %253 = vmatprep.subr.mxu0 0.0
  %254 = vmatpush1.msra.mxu0 %v85
  %255 = vmatprep.subr.mxu0 0.0
  %256 = vmatpush1.msra.mxu0 %v86
  %257 = vmatprep.subr.mxu0 0.0
  %258 = vmatpush1.msra.mxu0 %v87
  %259 = vmatprep.subr.mxu0 0.0
  %260 = vmatpush1.msra.mxu0 %v88
  %261 = vmatprep.subr.mxu0 0.0
  %262 = vmatpush1.msra.mxu0 %v89
  %263 = vmatprep.subr.mxu0 0.0
  %264 = vmatpush1.msra.mxu0 %v90
  %265 = vmatprep.subr.mxu0 0.0
  %266 = vmatpush1.msra.mxu0 %v91
  %267 = vmatprep.subr.mxu0 0.0
  %268 = vmatpush1.msra.mxu0 %v92
  %269 = vmatprep.subr.mxu0 0.0
  %270 = vmatpush1.msra.mxu0 %v93
  %271 = vmatprep.subr.mxu0 0.0
  %272 = vmatpush1.msra.mxu0 %v94
  %273 = vmatprep.subr.mxu0 0.0
  %274 = vmatpush1.msra.mxu0 %v95
  %275 = vmatprep.subr.mxu0 0.0
  %276 = vmatpush1.msra.mxu0 %v96
  %277 = vmatprep.subr.mxu0 0.0
  %278 = vmatpush1.msra.mxu0 %v97
  %279 = vmatprep.subr.mxu0 0.0
  %280 = vmatpush1.msra.mxu0 %v98
  %281 = vmatprep.subr.mxu0 0.0
  %282 = vmatpush1.msra.mxu0 %v99
  %283 = vmatprep.subr.mxu0 0.0
  %284 = vmatpush1.msra.mxu0 %v100
  %285 = vmatprep.subr.mxu0 0.0
  %286 = vmatpush1.msra.mxu0 %v101
  %287 = vmatprep.subr.mxu0 0.0
  %288 = vmatpush1.msra.mxu0 %v102
  %289 = vmatprep.subr.mxu0 0.0
  %290 = vmatpush1.msra.mxu0 %v103
  %291 = vmatprep.subr.mxu0 0.0
  %292 = vmatpush1.msra.mxu0 %v129
  %293 = vmatprep.subr.mxu0 0.0
  %294 = vmatpush1.msra.mxu0 0.0
  %295 = vmatprep.mubr.f32.mxu0 %v107
  %296 = vmatmul.mubr.f32.gmra.mrb[0].mxu0 %v16
  %v297 = vpop.f32.mrb[0].mxu0
  %v298 = vadd.f32 %v198, %v297
  %v299 = vpop.f32.mrb[0].mxu0
  %300 = vmatprep.mubr.f32.mxu0 %v110
  %301 = vmatmul.mubr.f32.gmra.mrb[0].mxu0 %v20
  %v302 = vpop.f32.mrb[0].mxu0
  %v303 = vadd.f32 %v203, %v302
  %v304 = vpop.f32.mrb[0].mxu0
  %305 = vmatprep.mubr.f32.mxu0 %v113
  %306 = vmatmul.mubr.f32.gmra.mrb[0].mxu0 %v24
  %v307 = vpop.f32.mrb[0].mxu0
  %v308 = vadd.f32 %v208, %v307
  %v309 = vpop.f32.mrb[0].mxu0
  %310 = vmatprep.mubr.f32.mxu0 %v116
  %311 = vmatmul.mubr.f32.gmra.mrb[0].mxu0 %v28
  %v312 = vpop.f32.mrb[0].mxu0
  %v313 = vadd.f32 %v213, %v312
  %v314 = vpop.f32.mrb[0].mxu0
  %315 = vmatprep.mubr.f32.mxu0 %v119
  %316 = vmatmul.mubr.f32.gmra.mrb[0].mxu0 %v32
  %v317 = vpop.f32.mrb[0].mxu0
  %v318 = vadd.f32 %v218, %v317
  %v319 = vpop.f32.mrb[0].mxu0
  %320 = vmatprep.mubr.f32.mxu0 %v122
  %321 = vmatmul.mubr.f32.gmra.mrb[0].mxu0 %v36
  %v322 = vpop.f32.mrb[0].mxu0
  %v323 = vadd.f32 %v223, %v322
  %v324 = vpop.f32.mrb[0].mxu0
  %325 = vmatprep.mubr.f32.mxu0 %v125
  %326 = vmatmul.mubr.f32.gmra.mrb[0].mxu0 %v40
  %v327 = vpop.f32.mrb[0].mxu0
  %v328 = vadd.f32 %v228, %v327
  %v329 = vpop.f32.mrb[0].mxu0
  %330 = vdwg.mxu0
  %s331 = scalar_lea.vmem %s2, 504
  %v332 = vld [vmem:[%s331] sm:$0xff]
  %v333 = vld [vmem:[%s331 + $0x8] sm:$0xff]
  %v334 = vld [vmem:[%s331 + $0x10] sm:$0xff]
  %v335 = vld [vmem:[%s331 + $0x18] sm:$0xff]
  %v336 = vld [vmem:[%s331 + $0x20] sm:$0xff]
  %v337 = vld [vmem:[%s331 + $0x28] sm:$0xff]
  %v338 = vld [vmem:[%s331 + $0x30] sm:$0xff]
  %v339 = vld [vmem:[%s331 + $0x38] sm:$0xff]
  %v340 = vld [vmem:[%s331 + $0x40] sm:$0xff]
  %v341 = vld [vmem:[%s331 + $0x48] sm:$0xff]
  %v342 = vld [vmem:[%s331 + $0x50] sm:$0xff]
  %v343 = vld [vmem:[%s331 + $0x58] sm:$0xff]
  %v344 = vld [vmem:[%s331 + $0x60] sm:$0xff]
  %v345 = vld [vmem:[%s331 + $0x68] sm:$0xff]
  %v346 = vld [vmem:[%s331 + $0x70] sm:$0xff]
  %v347 = vld [vmem:[%s331 + $0x78] sm:$0xff]
  %v348 = vld [vmem:[%s331 + $0x80] sm:$0xff]
  %v349 = vld [vmem:[%s331 + $0x88] sm:$0xff]
  %v350 = vld [vmem:[%s331 + $0x90] sm:$0xff]
  %v351 = vld [vmem:[%s331 + $0x98] sm:$0xff]
  %v352 = vld [vmem:[%s331 + $0xa0] sm:$0xff]
  %v353 = vld [vmem:[%s331 + $0xa8] sm:$0xff]
  %v354 = vld [vmem:[%s331 + $0xb0] sm:$0xff]
  %v355 = vld [vmem:[%s331 + $0xb8] sm:$0xff]
  %v356 = vld [vmem:[%s331 + $0xc0] sm:$0xff]
  %v357 = vld [vmem:[%s331 + $0xc8] sm:$0xff]
  %v358 = vld [vmem:[%s331 + $0xd0] sm:$0xff]
  %v359 = vld [vmem:[%s331 + $0xd8] sm:$0xff]
  %v360 = vld [vmem:[%s331 + $0xe0] sm:$0xff]
  %v361 = vld [vmem:[%s331 + $0xe8] sm:$0xff]
  %v362 = vld [vmem:[%s331 + $0xf0] sm:$0xff]
  %v363 = vld [vmem:[%s331 + $0xf8] sm:$0xff]
  %v364 = vld [vmem:[%s331 + $0x100] sm:$0xff]
  %v365 = vld [vmem:[%s331 + $0x108] sm:$0xff]
  %v366 = vld [vmem:[%s331 + $0x110] sm:$0xff]
  %v367 = vld [vmem:[%s331 + $0x118] sm:$0xff]
  %v368 = vld [vmem:[%s331 + $0x120] sm:$0xff]
  %v369 = vld [vmem:[%s331 + $0x128] sm:$0xff]
  %v370 = vld [vmem:[%s331 + $0x130] sm:$0xff]
  %v371 = vld [vmem:[%s331 + $0x138] sm:$0xff]
  %v372 = vld [vmem:[%s331 + $0x140] sm:$0xff]
  %v373 = vld [vmem:[%s331 + $0x148] sm:$0xff]
  %v374 = vld [vmem:[%s331 + $0x150] sm:$0xff]
  %v375 = vld [vmem:[%s331 + $0x158] sm:$0xff]
  %v376 = vld [vmem:[%s331 + $0x160] sm:$0xff]
  %v377 = vld [vmem:[%s331 + $0x168] sm:$0xff]
  %v378 = vld [vmem:[%s331 + $0x170] sm:$0xff]
  %v379 = vld [vmem:[%s331 + $0x178] sm:$0xff]
  %v380 = vld [vmem:[%s331 + $0x180] sm:$0xff]
  %v381 = vld [vmem:[%s331 + $0x188] sm:$0xff]
  %v382 = vld [vmem:[%s331 + $0x190] sm:$0xff]
  %v383 = vld [vmem:[%s331 + $0x198] sm:$0xff]
  %v384 = vld [vmem:[%s331 + $0x1a0] sm:$0xff]
  %v385 = vld [vmem:[%s331 + $0x1a8] sm:$0xff]
  %v386 = vld [vmem:[%s331 + $0x1b0] sm:$0xff]
  %v387 = vld [vmem:[%s331 + $0x1b8] sm:$0xff]
  %v388 = vld [vmem:[%s331 + $0x1c0] sm:$0xff]
  %v389 = vld [vmem:[%s331 + $0x1c8] sm:$0xff]
  %v390 = vld [vmem:[%s331 + $0x1d0] sm:$0xff]
  %v391 = vld [vmem:[%s331 + $0x1d8] sm:$0xff]
  %v392 = vld [vmem:[%s331 + $0x1e0] sm:$0xff]
  %v393 = vld [vmem:[%s331 + $0x1e8] sm:$0xff]
  %v394 = vld [vmem:[%s331 + $0x1f0] sm:$0xf]
  %v396 = vsel %vm127, %v394, 0
  %398 = vmatprep.subr.mxu0 0.0
  %399 = vmatpush1.msra.mxu0 %v332
  %400 = vmatprep.subr.mxu0 0.0
  %401 = vmatpush1.msra.mxu0 %v333
  %402 = vmatprep.subr.mxu0 0.0
  %403 = vmatpush1.msra.mxu0 %v334
  %404 = vmatprep.subr.mxu0 0.0
  %405 = vmatpush1.msra.mxu0 %v335
  %406 = vmatprep.subr.mxu0 0.0
  %407 = vmatpush1.msra.mxu0 %v336
  %408 = vmatprep.subr.mxu0 0.0
  %409 = vmatpush1.msra.mxu0 %v337
  %410 = vmatprep.subr.mxu0 0.0
  %411 = vmatpush1.msra.mxu0 %v338
  %412 = vmatprep.subr.mxu0 0.0
  %413 = vmatpush1.msra.mxu0 %v339
  %414 = vmatprep.subr.mxu0 0.0
  %415 = vmatpush1.msra.mxu0 %v340
  %416 = vmatprep.subr.mxu0 0.0
  %417 = vmatpush1.msra.mxu0 %v341
  %418 = vmatprep.subr.mxu0 0.0
  %419 = vmatpush1.msra.mxu0 %v342
  %420 = vmatprep.subr.mxu0 0.0
  %421 = vmatpush1.msra.mxu0 %v343
  %422 = vmatprep.subr.mxu0 0.0
  %423 = vmatpush1.msra.mxu0 %v344
  %424 = vmatprep.subr.mxu0 0.0
  %425 = vmatpush1.msra.mxu0 %v345
  %426 = vmatprep.subr.mxu0 0.0
  %427 = vmatpush1.msra.mxu0 %v346
  %428 = vmatprep.subr.mxu0 0.0
  %429 = vmatpush1.msra.mxu0 %v347
  %430 = vmatprep.subr.mxu0 0.0
  %431 = vmatpush1.msra.mxu0 %v348
  %432 = vmatprep.subr.mxu0 0.0
  %433 = vmatpush1.msra.mxu0 %v349
  %434 = vmatprep.subr.mxu0 0.0
  %435 = vmatpush1.msra.mxu0 %v350
  %436 = vmatprep.subr.mxu0 0.0
  %437 = vmatpush1.msra.mxu0 %v351
  %438 = vmatprep.subr.mxu0 0.0
  %439 = vmatpush1.msra.mxu0 %v352
  %440 = vmatprep.subr.mxu0 0.0
  %441 = vmatpush1.msra.mxu0 %v353
  %442 = vmatprep.subr.mxu0 0.0
  %443 = vmatpush1.msra.mxu0 %v354
  %444 = vmatprep.subr.mxu0 0.0
  %445 = vmatpush1.msra.mxu0 %v355
  %446 = vmatprep.subr.mxu0 0.0
  %447 = vmatpush1.msra.mxu0 %v356
  %448 = vmatprep.subr.mxu0 0.0
  %449 = vmatpush1.msra.mxu0 %v357
  %450 = vmatprep.subr.mxu0 0.0
  %451 = vmatpush1.msra.mxu0 %v358
  %452 = vmatprep.subr.mxu0 0.0
  %453 = vmatpush1.msra.mxu0 %v359
  %454 = vmatprep.subr.mxu0 0.0
  %455 = vmatpush1.msra.mxu0 %v360
  %456 = vmatprep.subr.mxu0 0.0
  %457 = vmatpush1.msra.mxu0 %v361
  %458 = vmatprep.subr.mxu0 0.0
  %459 = vmatpush1.msra.mxu0 %v362
  %460 = vmatprep.subr.mxu0 0.0
  %461 = vmatpush1.msra.mxu0 %v363
  %462 = vmatprep.mubr.f32.mxu0 %v15
  %463 = vmatmul.mubr.f32.gmra.mrb[0].mxu0 %v14
  %v464 = vpop.f32.mrb[0].mxu0
  %v465 = vadd.f32 0.0, %v464
  %v466 = vpop.f32.mrb[0].mxu0
  %467 = vmatprep.mubr.f32.mxu0 %v19
  %468 = vmatmul.mubr.f32.gmra.mrb[0].mxu0 %v18
  %v469 = vpop.f32.mrb[0].mxu0
  %v470 = vadd.f32 0.0, %v469
  %v471 = vpop.f32.mrb[0].mxu0
  %472 = vmatprep.mubr.f32.mxu0 %v23
  %473 = vmatmul.mubr.f32.gmra.mrb[0].mxu0 %v22
  %v474 = vpop.f32.mrb[0].mxu0
  %v475 = vadd.f32 0.0, %v474
  %v476 = vpop.f32.mrb[0].mxu0
  %477 = vmatprep.mubr.f32.mxu0 %v27
  %478 = vmatmul.mubr.f32.gmra.mrb[0].mxu0 %v26
  %v479 = vpop.f32.mrb[0].mxu0
  %v480 = vadd.f32 0.0, %v479
  %v481 = vpop.f32.mrb[0].mxu0
  %482 = vmatprep.mubr.f32.mxu0 %v31
  %483 = vmatmul.mubr.f32.gmra.mrb[0].mxu0 %v30
  %v484 = vpop.f32.mrb[0].mxu0
  %v485 = vadd.f32 0.0, %v484
  %v486 = vpop.f32.mrb[0].mxu0
  %487 = vmatprep.mubr.f32.mxu0 %v35
  %488 = vmatmul.mubr.f32.gmra.mrb[0].mxu0 %v34
  %v489 = vpop.f32.mrb[0].mxu0
  %v490 = vadd.f32 0.0, %v489
  %v491 = vpop.f32.mrb[0].mxu0
  %492 = vmatprep.mubr.f32.mxu0 %v39
  %493 = vmatmul.mubr.f32.gmra.mrb[0].mxu0 %v38
  %v494 = vpop.f32.mrb[0].mxu0
  %v495 = vadd.f32 0.0, %v494
  %v496 = vpop.f32.mrb[0].mxu0
  %497 = vdwg.mxu0
  %498 = vmatprep.subr.mxu0 0.0
  %499 = vmatpush1.msra.mxu0 %v364
  %500 = vmatprep.subr.mxu0 0.0
  %501 = vmatpush1.msra.mxu0 %v365
  %502 = vmatprep.subr.mxu0 0.0
  %503 = vmatpush1.msra.mxu0 %v366
  %504 = vmatprep.subr.mxu0 0.0
  %505 = vmatpush1.msra.mxu0 %v367
  %506 = vmatprep.subr.mxu0 0.0
  %507 = vmatpush1.msra.mxu0 %v368
  %508 = vmatprep.subr.mxu0 0.0
  %509 = vmatpush1.msra.mxu0 %v369
  %510 = vmatprep.subr.mxu0 0.0
  %511 = vmatpush1.msra.mxu0 %v370
  %512 = vmatprep.subr.mxu0 0.0
  %513 = vmatpush1.msra.mxu0 %v371
  %514 = vmatprep.subr.mxu0 0.0
  %515 = vmatpush1.msra.mxu0 %v372
  %516 = vmatprep.subr.mxu0 0.0
  %517 = vmatpush1.msra.mxu0 %v373
  %518 = vmatprep.subr.mxu0 0.0
  %519 = vmatpush1.msra.mxu0 %v374
  %520 = vmatprep.subr.mxu0 0.0
  %521 = vmatpush1.msra.mxu0 %v375
  %522 = vmatprep.subr.mxu0 0.0
  %523 = vmatpush1.msra.mxu0 %v376
  %524 = vmatprep.subr.mxu0 0.0
  %525 = vmatpush1.msra.mxu0 %v377
  %526 = vmatprep.subr.mxu0 0.0
  %527 = vmatpush1.msra.mxu0 %v378
  %528 = vmatprep.subr.mxu0 0.0
  %529 = vmatpush1.msra.mxu0 %v379
  %530 = vmatprep.subr.mxu0 0.0
  %531 = vmatpush1.msra.mxu0 %v380
  %532 = vmatprep.subr.mxu0 0.0
  %533 = vmatpush1.msra.mxu0 %v381
  %534 = vmatprep.subr.mxu0 0.0
  %535 = vmatpush1.msra.mxu0 %v382
  %536 = vmatprep.subr.mxu0 0.0
  %537 = vmatpush1.msra.mxu0 %v383
  %538 = vmatprep.subr.mxu0 0.0
  %539 = vmatpush1.msra.mxu0 %v384
  %540 = vmatprep.subr.mxu0 0.0
  %541 = vmatpush1.msra.mxu0 %v385
  %542 = vmatprep.subr.mxu0 0.0
  %543 = vmatpush1.msra.mxu0 %v386
  %544 = vmatprep.subr.mxu0 0.0
  %545 = vmatpush1.msra.mxu0 %v387
  %546 = vmatprep.subr.mxu0 0.0
  %547 = vmatpush1.msra.mxu0 %v388
  %548 = vmatprep.subr.mxu0 0.0
  %549 = vmatpush1.msra.mxu0 %v389
  %550 = vmatprep.subr.mxu0 0.0
  %551 = vmatpush1.msra.mxu0 %v390
  %552 = vmatprep.subr.mxu0 0.0
  %553 = vmatpush1.msra.mxu0 %v391
  %554 = vmatprep.subr.mxu0 0.0
  %555 = vmatpush1.msra.mxu0 %v392
  %556 = vmatprep.subr.mxu0 0.0
  %557 = vmatpush1.msra.mxu0 %v393
  %558 = vmatprep.subr.mxu0 0.0
  %559 = vmatpush1.msra.mxu0 %v396
  %560 = vmatprep.subr.mxu0 0.0
  %561 = vmatpush1.msra.mxu0 0.0
  %562 = vmatprep.mubr.f32.mxu0 %v107
  %563 = vmatmul.mubr.f32.gmra.mrb[0].mxu0 %v16
  %v564 = vpop.f32.mrb[0].mxu0
  %v565 = vadd.f32 %v465, %v564
  %v566 = vpop.f32.mrb[0].mxu0
  %567 = vmatprep.mubr.f32.mxu0 %v110
  %568 = vmatmul.mubr.f32.gmra.mrb[0].mxu0 %v20
  %v569 = vpop.f32.mrb[0].mxu0
  %v570 = vadd.f32 %v470, %v569
  %v571 = vpop.f32.mrb[0].mxu0
  %572 = vmatprep.mubr.f32.mxu0 %v113
  %573 = vmatmul.mubr.f32.gmra.mrb[0].mxu0 %v24
  %v574 = vpop.f32.mrb[0].mxu0
  %v575 = vadd.f32 %v475, %v574
  %v576 = vpop.f32.mrb[0].mxu0
  %577 = vmatprep.mubr.f32.mxu0 %v116
  %578 = vmatmul.mubr.f32.gmra.mrb[0].mxu0 %v28
  %v579 = vpop.f32.mrb[0].mxu0
  %v580 = vadd.f32 %v480, %v579
  %v581 = vpop.f32.mrb[0].mxu0
  %582 = vmatprep.mubr.f32.mxu0 %v119
  %583 = vmatmul.mubr.f32.gmra.mrb[0].mxu0 %v32
  %v584 = vpop.f32.mrb[0].mxu0
  %v585 = vadd.f32 %v485, %v584
  %v586 = vpop.f32.mrb[0].mxu0
  %587 = vmatprep.mubr.f32.mxu0 %v122
  %588 = vmatmul.mubr.f32.gmra.mrb[0].mxu0 %v36
  %v589 = vpop.f32.mrb[0].mxu0
  %v590 = vadd.f32 %v490, %v589
  %v591 = vpop.f32.mrb[0].mxu0
  %592 = vmatprep.mubr.f32.mxu0 %v125
  %593 = vmatmul.mubr.f32.gmra.mrb[0].mxu0 %v40
  %v594 = vpop.f32.mrb[0].mxu0
  %v595 = vadd.f32 %v495, %v594
  %v596 = vpop.f32.mrb[0].mxu0
  %597 = vdwg.mxu0
  %s598 = scalar_lea.vmem %s2, 1008
  %v599 = vld [vmem:[%s598] sm:$0xff]
  %v600 = vld [vmem:[%s598 + $0x8] sm:$0xff]
  %v601 = vld [vmem:[%s598 + $0x10] sm:$0xff]
  %v602 = vld [vmem:[%s598 + $0x18] sm:$0xff]
  %v603 = vld [vmem:[%s598 + $0x20] sm:$0xff]
  %v604 = vld [vmem:[%s598 + $0x28] sm:$0xff]
  %v605 = vld [vmem:[%s598 + $0x30] sm:$0xff]
  %v606 = vld [vmem:[%s598 + $0x38] sm:$0xff]
  %v607 = vld [vmem:[%s598 + $0x40] sm:$0xff]
  %v608 = vld [vmem:[%s598 + $0x48] sm:$0xff]
  %v609 = vld [vmem:[%s598 + $0x50] sm:$0xff]
  %v610 = vld [vmem:[%s598 + $0x58] sm:$0xff]
  %v611 = vld [vmem:[%s598 + $0x60] sm:$0xff]
  %v612 = vld [vmem:[%s598 + $0x68] sm:$0xff]
  %v613 = vld [vmem:[%s598 + $0x70] sm:$0xff]
  %v614 = vld [vmem:[%s598 + $0x78] sm:$0xff]
  %v615 = vld [vmem:[%s598 + $0x80] sm:$0xff]
  %v616 = vld [vmem:[%s598 + $0x88] sm:$0xff]
  %v617 = vld [vmem:[%s598 + $0x90] sm:$0xff]
  %v618 = vld [vmem:[%s598 + $0x98] sm:$0xff]
  %v619 = vld [vmem:[%s598 + $0xa0] sm:$0xff]
  %v620 = vld [vmem:[%s598 + $0xa8] sm:$0xff]
  %v621 = vld [vmem:[%s598 + $0xb0] sm:$0xff]
  %v622 = vld [vmem:[%s598 + $0xb8] sm:$0xff]
  %v623 = vld [vmem:[%s598 + $0xc0] sm:$0xff]
  %v624 = vld [vmem:[%s598 + $0xc8] sm:$0xff]
  %v625 = vld [vmem:[%s598 + $0xd0] sm:$0xff]
  %v626 = vld [vmem:[%s598 + $0xd8] sm:$0xff]
  %v627 = vld [vmem:[%s598 + $0xe0] sm:$0xff]
  %v628 = vld [vmem:[%s598 + $0xe8] sm:$0xff]
  %v629 = vld [vmem:[%s598 + $0xf0] sm:$0xff]
  %v630 = vld [vmem:[%s598 + $0xf8] sm:$0xff]
  %v631 = vld [vmem:[%s598 + $0x100] sm:$0xff]
  %v632 = vld [vmem:[%s598 + $0x108] sm:$0xff]
  %v633 = vld [vmem:[%s598 + $0x110] sm:$0xff]
  %v634 = vld [vmem:[%s598 + $0x118] sm:$0xff]
  %v635 = vld [vmem:[%s598 + $0x120] sm:$0xff]
  %v636 = vld [vmem:[%s598 + $0x128] sm:$0xff]
  %v637 = vld [vmem:[%s598 + $0x130] sm:$0xff]
  %v638 = vld [vmem:[%s598 + $0x138] sm:$0xff]
  %v639 = vld [vmem:[%s598 + $0x140] sm:$0xff]
  %v640 = vld [vmem:[%s598 + $0x148] sm:$0xff]
  %v641 = vld [vmem:[%s598 + $0x150] sm:$0xff]
  %v642 = vld [vmem:[%s598 + $0x158] sm:$0xff]
  %v643 = vld [vmem:[%s598 + $0x160] sm:$0xff]
  %v644 = vld [vmem:[%s598 + $0x168] sm:$0xff]
  %v645 = vld [vmem:[%s598 + $0x170] sm:$0xff]
  %v646 = vld [vmem:[%s598 + $0x178] sm:$0xff]
  %v647 = vld [vmem:[%s598 + $0x180] sm:$0xff]
  %v648 = vld [vmem:[%s598 + $0x188] sm:$0xff]
  %v649 = vld [vmem:[%s598 + $0x190] sm:$0xff]
  %v650 = vld [vmem:[%s598 + $0x198] sm:$0xff]
  %v651 = vld [vmem:[%s598 + $0x1a0] sm:$0xff]
  %v652 = vld [vmem:[%s598 + $0x1a8] sm:$0xff]
  %v653 = vld [vmem:[%s598 + $0x1b0] sm:$0xff]
  %v654 = vld [vmem:[%s598 + $0x1b8] sm:$0xff]
  %v655 = vld [vmem:[%s598 + $0x1c0] sm:$0xff]
  %v656 = vld [vmem:[%s598 + $0x1c8] sm:$0xff]
  %v657 = vld [vmem:[%s598 + $0x1d0] sm:$0xff]
  %v658 = vld [vmem:[%s598 + $0x1d8] sm:$0xff]
  %v659 = vld [vmem:[%s598 + $0x1e0] sm:$0xff]
  %v660 = vld [vmem:[%s598 + $0x1e8] sm:$0xff]
  %v661 = vld [vmem:[%s598 + $0x1f0] sm:$0xf]
  %v663 = vsel %vm127, %v661, 0
  %665 = vmatprep.subr.mxu0 0.0
  %666 = vmatpush1.msra.mxu0 %v599
  %667 = vmatprep.subr.mxu0 0.0
  %668 = vmatpush1.msra.mxu0 %v600
  %669 = vmatprep.subr.mxu0 0.0
  %670 = vmatpush1.msra.mxu0 %v601
  %671 = vmatprep.subr.mxu0 0.0
  %672 = vmatpush1.msra.mxu0 %v602
  %673 = vmatprep.subr.mxu0 0.0
  %674 = vmatpush1.msra.mxu0 %v603
  %675 = vmatprep.subr.mxu0 0.0
  %676 = vmatpush1.msra.mxu0 %v604
  %677 = vmatprep.subr.mxu0 0.0
  %678 = vmatpush1.msra.mxu0 %v605
  %679 = vmatprep.subr.mxu0 0.0
  %680 = vmatpush1.msra.mxu0 %v606
  %681 = vmatprep.subr.mxu0 0.0
  %682 = vmatpush1.msra.mxu0 %v607
  %683 = vmatprep.subr.mxu0 0.0
  %684 = vmatpush1.msra.mxu0 %v608
  %685 = vmatprep.subr.mxu0 0.0
  %686 = vmatpush1.msra.mxu0 %v609
  %687 = vmatprep.subr.mxu0 0.0
  %688 = vmatpush1.msra.mxu0 %v610
  %689 = vmatprep.subr.mxu0 0.0
  %690 = vmatpush1.msra.mxu0 %v611
  %691 = vmatprep.subr.mxu0 0.0
  %692 = vmatpush1.msra.mxu0 %v612
  %693 = vmatprep.subr.mxu0 0.0
  %694 = vmatpush1.msra.mxu0 %v613
  %695 = vmatprep.subr.mxu0 0.0
  %696 = vmatpush1.msra.mxu0 %v614
  %697 = vmatprep.subr.mxu0 0.0
  %698 = vmatpush1.msra.mxu0 %v615
  %699 = vmatprep.subr.mxu0 0.0
  %700 = vmatpush1.msra.mxu0 %v616
  %701 = vmatprep.subr.mxu0 0.0
  %702 = vmatpush1.msra.mxu0 %v617
  %703 = vmatprep.subr.mxu0 0.0
  %704 = vmatpush1.msra.mxu0 %v618
  %705 = vmatprep.subr.mxu0 0.0
  %706 = vmatpush1.msra.mxu0 %v619
  %707 = vmatprep.subr.mxu0 0.0
  %708 = vmatpush1.msra.mxu0 %v620
  %709 = vmatprep.subr.mxu0 0.0
  %710 = vmatpush1.msra.mxu0 %v621
  %711 = vmatprep.subr.mxu0 0.0
  %712 = vmatpush1.msra.mxu0 %v622
  %713 = vmatprep.subr.mxu0 0.0
  %714 = vmatpush1.msra.mxu0 %v623
  %715 = vmatprep.subr.mxu0 0.0
  %716 = vmatpush1.msra.mxu0 %v624
  %717 = vmatprep.subr.mxu0 0.0
  %718 = vmatpush1.msra.mxu0 %v625
  %719 = vmatprep.subr.mxu0 0.0
  %720 = vmatpush1.msra.mxu0 %v626
  %721 = vmatprep.subr.mxu0 0.0
  %722 = vmatpush1.msra.mxu0 %v627
  %723 = vmatprep.subr.mxu0 0.0
  %724 = vmatpush1.msra.mxu0 %v628
  %725 = vmatprep.subr.mxu0 0.0
  %726 = vmatpush1.msra.mxu0 %v629
  %727 = vmatprep.subr.mxu0 0.0
  %728 = vmatpush1.msra.mxu0 %v630
  %729 = vmatprep.mubr.f32.mxu0 %v15
  %730 = vmatmul.mubr.f32.gmra.mrb[0].mxu0 %v14
  %v731 = vpop.f32.mrb[0].mxu0
  %v732 = vadd.f32 0.0, %v731
  %v733 = vpop.f32.mrb[0].mxu0
  %734 = vmatprep.mubr.f32.mxu0 %v19
  %735 = vmatmul.mubr.f32.gmra.mrb[0].mxu0 %v18
  %v736 = vpop.f32.mrb[0].mxu0
  %v737 = vadd.f32 0.0, %v736
  %v738 = vpop.f32.mrb[0].mxu0
  %739 = vmatprep.mubr.f32.mxu0 %v23
  %740 = vmatmul.mubr.f32.gmra.mrb[0].mxu0 %v22
  %v741 = vpop.f32.mrb[0].mxu0
  %v742 = vadd.f32 0.0, %v741
  %v743 = vpop.f32.mrb[0].mxu0
  %744 = vmatprep.mubr.f32.mxu0 %v27
  %745 = vmatmul.mubr.f32.gmra.mrb[0].mxu0 %v26
  %v746 = vpop.f32.mrb[0].mxu0
  %v747 = vadd.f32 0.0, %v746
  %v748 = vpop.f32.mrb[0].mxu0
  %749 = vmatprep.mubr.f32.mxu0 %v31
  %750 = vmatmul.mubr.f32.gmra.mrb[0].mxu0 %v30
  %v751 = vpop.f32.mrb[0].mxu0
  %v752 = vadd.f32 0.0, %v751
  %v753 = vpop.f32.mrb[0].mxu0
  %754 = vmatprep.mubr.f32.mxu0 %v35
  %755 = vmatmul.mubr.f32.gmra.mrb[0].mxu0 %v34
  %v756 = vpop.f32.mrb[0].mxu0
  %v757 = vadd.f32 0.0, %v756
  %v758 = vpop.f32.mrb[0].mxu0
  %759 = vmatprep.mubr.f32.mxu0 %v39
  %760 = vmatmul.mubr.f32.gmra.mrb[0].mxu0 %v38
  %v761 = vpop.f32.mrb[0].mxu0
  %v762 = vadd.f32 0.0, %v761
  %v763 = vpop.f32.mrb[0].mxu0
  %764 = vdwg.mxu0
  %765 = vmatprep.subr.mxu0 0.0
  %766 = vmatpush1.msra.mxu0 %v631
  %767 = vmatprep.subr.mxu0 0.0
  %768 = vmatpush1.msra.mxu0 %v632
  %769 = vmatprep.subr.mxu0 0.0
  %770 = vmatpush1.msra.mxu0 %v633
  %771 = vmatprep.subr.mxu0 0.0
  %772 = vmatpush1.msra.mxu0 %v634
  %773 = vmatprep.subr.mxu0 0.0
  %774 = vmatpush1.msra.mxu0 %v635
  %775 = vmatprep.subr.mxu0 0.0
  %776 = vmatpush1.msra.mxu0 %v636
  %777 = vmatprep.subr.mxu0 0.0
  %778 = vmatpush1.msra.mxu0 %v637
  %779 = vmatprep.subr.mxu0 0.0
  %780 = vmatpush1.msra.mxu0 %v638
  %781 = vmatprep.subr.mxu0 0.0
  %782 = vmatpush1.msra.mxu0 %v639
  %783 = vmatprep.subr.mxu0 0.0
  %784 = vmatpush1.msra.mxu0 %v640
  %785 = vmatprep.subr.mxu0 0.0
  %786 = vmatpush1.msra.mxu0 %v641
  %787 = vmatprep.subr.mxu0 0.0
  %788 = vmatpush1.msra.mxu0 %v642
  %789 = vmatprep.subr.mxu0 0.0
  %790 = vmatpush1.msra.mxu0 %v643
  %791 = vmatprep.subr.mxu0 0.0
  %792 = vmatpush1.msra.mxu0 %v644
  %793 = vmatprep.subr.mxu0 0.0
  %794 = vmatpush1.msra.mxu0 %v645
  %795 = vmatprep.subr.mxu0 0.0
  %796 = vmatpush1.msra.mxu0 %v646
  %797 = vmatprep.subr.mxu0 0.0
  %798 = vmatpush1.msra.mxu0 %v647
  %799 = vmatprep.subr.mxu0 0.0
  %800 = vmatpush1.msra.mxu0 %v648
  %801 = vmatprep.subr.mxu0 0.0
  %802 = vmatpush1.msra.mxu0 %v649
  %803 = vmatprep.subr.mxu0 0.0
  %804 = vmatpush1.msra.mxu0 %v650
  %805 = vmatprep.subr.mxu0 0.0
  %806 = vmatpush1.msra.mxu0 %v651
  %807 = vmatprep.subr.mxu0 0.0
  %808 = vmatpush1.msra.mxu0 %v652
  %809 = vmatprep.subr.mxu0 0.0
  %810 = vmatpush1.msra.mxu0 %v653
  %811 = vmatprep.subr.mxu0 0.0
  %812 = vmatpush1.msra.mxu0 %v654
  %813 = vmatprep.subr.mxu0 0.0
  %814 = vmatpush1.msra.mxu0 %v655
  %815 = vmatprep.subr.mxu0 0.0
  %816 = vmatpush1.msra.mxu0 %v656
  %817 = vmatprep.subr.mxu0 0.0
  %818 = vmatpush1.msra.mxu0 %v657
  %819 = vmatprep.subr.mxu0 0.0
  %820 = vmatpush1.msra.mxu0 %v658
  %821 = vmatprep.subr.mxu0 0.0
  %822 = vmatpush1.msra.mxu0 %v659
  %823 = vmatprep.subr.mxu0 0.0
  %824 = vmatpush1.msra.mxu0 %v660
  %825 = vmatprep.subr.mxu0 0.0
  %826 = vmatpush1.msra.mxu0 %v663
  %827 = vmatprep.subr.mxu0 0.0
  %828 = vmatpush1.msra.mxu0 0.0
  %829 = vmatprep.mubr.f32.mxu0 %v107
  %830 = vmatmul.mubr.f32.gmra.mrb[0].mxu0 %v16
  %v831 = vpop.f32.mrb[0].mxu0
  %v832 = vadd.f32 %v732, %v831
  %v833 = vpop.f32.mrb[0].mxu0
  %834 = vmatprep.mubr.f32.mxu0 %v110
  %835 = vmatmul.mubr.f32.gmra.mrb[0].mxu0 %v20
  %v836 = vpop.f32.mrb[0].mxu0
  %v837 = vadd.f32 %v737, %v836
  %v838 = vpop.f32.mrb[0].mxu0
  %839 = vmatprep.mubr.f32.mxu0 %v113
  %840 = vmatmul.mubr.f32.gmra.mrb[0].mxu0 %v24
  %v841 = vpop.f32.mrb[0].mxu0
  %v842 = vadd.f32 %v742, %v841
  %v843 = vpop.f32.mrb[0].mxu0
  %844 = vmatprep.mubr.f32.mxu0 %v116
  %845 = vmatmul.mubr.f32.gmra.mrb[0].mxu0 %v28
  %v846 = vpop.f32.mrb[0].mxu0
  %v847 = vadd.f32 %v747, %v846
  %v848 = vpop.f32.mrb[0].mxu0
  %849 = vmatprep.mubr.f32.mxu0 %v119
  %850 = vmatmul.mubr.f32.gmra.mrb[0].mxu0 %v32
  %v851 = vpop.f32.mrb[0].mxu0
  %v852 = vadd.f32 %v752, %v851
  %v853 = vpop.f32.mrb[0].mxu0
  %854 = vmatprep.mubr.f32.mxu0 %v122
  %855 = vmatmul.mubr.f32.gmra.mrb[0].mxu0 %v36
  %v856 = vpop.f32.mrb[0].mxu0
  %v857 = vadd.f32 %v757, %v856
  %v858 = vpop.f32.mrb[0].mxu0
  %859 = vmatprep.mubr.f32.mxu0 %v125
  %860 = vmatmul.mubr.f32.gmra.mrb[0].mxu0 %v40
  %v861 = vpop.f32.mrb[0].mxu0
  %v862 = vadd.f32 %v762, %v861
  %v863 = vpop.f32.mrb[0].mxu0
  %864 = vdwg.mxu0
  %s865 = scalar_lea.vmem %s2, 1512
  %v866 = vld [vmem:[%s865] sm:$0xff]
  %v867 = vld [vmem:[%s865 + $0x8] sm:$0xff]
  %v868 = vld [vmem:[%s865 + $0x10] sm:$0xff]
  %v869 = vld [vmem:[%s865 + $0x18] sm:$0xff]
  %v870 = vld [vmem:[%s865 + $0x20] sm:$0xff]
  %v871 = vld [vmem:[%s865 + $0x28] sm:$0xff]
  %v872 = vld [vmem:[%s865 + $0x30] sm:$0xff]
  %v873 = vld [vmem:[%s865 + $0x38] sm:$0xff]
  %v874 = vld [vmem:[%s865 + $0x40] sm:$0xff]
  %v875 = vld [vmem:[%s865 + $0x48] sm:$0xff]
  %v876 = vld [vmem:[%s865 + $0x50] sm:$0xff]
  %v877 = vld [vmem:[%s865 + $0x58] sm:$0xff]
  %v878 = vld [vmem:[%s865 + $0x60] sm:$0xff]
  %v879 = vld [vmem:[%s865 + $0x68] sm:$0xff]
  %v880 = vld [vmem:[%s865 + $0x70] sm:$0xff]
  %v881 = vld [vmem:[%s865 + $0x78] sm:$0xff]
  %v882 = vld [vmem:[%s865 + $0x80] sm:$0xff]
  %v883 = vld [vmem:[%s865 + $0x88] sm:$0xff]
  %v884 = vld [vmem:[%s865 + $0x90] sm:$0xff]
  %v885 = vld [vmem:[%s865 + $0x98] sm:$0xff]
  %v886 = vld [vmem:[%s865 + $0xa0] sm:$0xff]
  %v887 = vld [vmem:[%s865 + $0xa8] sm:$0xff]
  %v888 = vld [vmem:[%s865 + $0xb0] sm:$0xff]
  %v889 = vld [vmem:[%s865 + $0xb8] sm:$0xff]
  %v890 = vld [vmem:[%s865 + $0xc0] sm:$0xff]
  %v891 = vld [vmem:[%s865 + $0xc8] sm:$0xff]
  %v892 = vld [vmem:[%s865 + $0xd0] sm:$0xff]
  %v893 = vld [vmem:[%s865 + $0xd8] sm:$0xff]
  %v894 = vld [vmem:[%s865 + $0xe0] sm:$0xff]
  %v895 = vld [vmem:[%s865 + $0xe8] sm:$0xff]
  %v896 = vld [vmem:[%s865 + $0xf0] sm:$0xff]
  %v897 = vld [vmem:[%s865 + $0xf8] sm:$0xff]
  %v898 = vld [vmem:[%s865 + $0x100] sm:$0xff]
  %v899 = vld [vmem:[%s865 + $0x108] sm:$0xff]
  %v900 = vld [vmem:[%s865 + $0x110] sm:$0xff]
  %v901 = vld [vmem:[%s865 + $0x118] sm:$0xff]
  %v902 = vld [vmem:[%s865 + $0x120] sm:$0xff]
  %v903 = vld [vmem:[%s865 + $0x128] sm:$0xff]
  %v904 = vld [vmem:[%s865 + $0x130] sm:$0xff]
  %v905 = vld [vmem:[%s865 + $0x138] sm:$0xff]
  %v906 = vld [vmem:[%s865 + $0x140] sm:$0xff]
  %v907 = vld [vmem:[%s865 + $0x148] sm:$0xff]
  %v908 = vld [vmem:[%s865 + $0x150] sm:$0xff]
  %v909 = vld [vmem:[%s865 + $0x158] sm:$0xff]
  %v910 = vld [vmem:[%s865 + $0x160] sm:$0xff]
  %v911 = vld [vmem:[%s865 + $0x168] sm:$0xff]
  %v912 = vld [vmem:[%s865 + $0x170] sm:$0xff]
  %v913 = vld [vmem:[%s865 + $0x178] sm:$0xff]
  %v914 = vld [vmem:[%s865 + $0x180] sm:$0xff]
  %v915 = vld [vmem:[%s865 + $0x188] sm:$0xff]
  %v916 = vld [vmem:[%s865 + $0x190] sm:$0xff]
  %v917 = vld [vmem:[%s865 + $0x198] sm:$0xff]
  %v918 = vld [vmem:[%s865 + $0x1a0] sm:$0xff]
  %v919 = vld [vmem:[%s865 + $0x1a8] sm:$0xff]
  %v920 = vld [vmem:[%s865 + $0x1b0] sm:$0xff]
  %v921 = vld [vmem:[%s865 + $0x1b8] sm:$0xff]
  %v922 = vld [vmem:[%s865 + $0x1c0] sm:$0xff]
  %v923 = vld [vmem:[%s865 + $0x1c8] sm:$0xff]
  %v924 = vld [vmem:[%s865 + $0x1d0] sm:$0xff]
  %v925 = vld [vmem:[%s865 + $0x1d8] sm:$0xff]
  %v926 = vld [vmem:[%s865 + $0x1e0] sm:$0xff]
  %v927 = vld [vmem:[%s865 + $0x1e8] sm:$0xff]
  %v928 = vld [vmem:[%s865 + $0x1f0] sm:$0xf]
  %v930 = vsel %vm127, %v928, 0
  %932 = vmatprep.subr.mxu0 0.0
  %933 = vmatpush1.msra.mxu0 %v866
  %934 = vmatprep.subr.mxu0 0.0
  %935 = vmatpush1.msra.mxu0 %v867
  %936 = vmatprep.subr.mxu0 0.0
  %937 = vmatpush1.msra.mxu0 %v868
  %938 = vmatprep.subr.mxu0 0.0
  %939 = vmatpush1.msra.mxu0 %v869
  %940 = vmatprep.subr.mxu0 0.0
  %941 = vmatpush1.msra.mxu0 %v870
  %942 = vmatprep.subr.mxu0 0.0
  %943 = vmatpush1.msra.mxu0 %v871
  %944 = vmatprep.subr.mxu0 0.0
  %945 = vmatpush1.msra.mxu0 %v872
  %946 = vmatprep.subr.mxu0 0.0
  %947 = vmatpush1.msra.mxu0 %v873
  %948 = vmatprep.subr.mxu0 0.0
  %949 = vmatpush1.msra.mxu0 %v874
  %950 = vmatprep.subr.mxu0 0.0
  %951 = vmatpush1.msra.mxu0 %v875
  %952 = vmatprep.subr.mxu0 0.0
  %953 = vmatpush1.msra.mxu0 %v876
  %954 = vmatprep.subr.mxu0 0.0
  %955 = vmatpush1.msra.mxu0 %v877
  %956 = vmatprep.subr.mxu0 0.0
  %957 = vmatpush1.msra.mxu0 %v878
  %958 = vmatprep.subr.mxu0 0.0
  %959 = vmatpush1.msra.mxu0 %v879
  %960 = vmatprep.subr.mxu0 0.0
  %961 = vmatpush1.msra.mxu0 %v880
  %962 = vmatprep.subr.mxu0 0.0
  %963 = vmatpush1.msra.mxu0 %v881
  %964 = vmatprep.subr.mxu0 0.0
  %965 = vmatpush1.msra.mxu0 %v882
  %966 = vmatprep.subr.mxu0 0.0
  %967 = vmatpush1.msra.mxu0 %v883
  %968 = vmatprep.subr.mxu0 0.0
  %969 = vmatpush1.msra.mxu0 %v884
  %970 = vmatprep.subr.mxu0 0.0
  %971 = vmatpush1.msra.mxu0 %v885
  %972 = vmatprep.subr.mxu0 0.0
  %973 = vmatpush1.msra.mxu0 %v886
  %974 = vmatprep.subr.mxu0 0.0
  %975 = vmatpush1.msra.mxu0 %v887
  %976 = vmatprep.subr.mxu0 0.0
  %977 = vmatpush1.msra.mxu0 %v888
  %978 = vmatprep.subr.mxu0 0.0
  %979 = vmatpush1.msra.mxu0 %v889
  %980 = vmatprep.subr.mxu0 0.0
  %981 = vmatpush1.msra.mxu0 %v890
  %982 = vmatprep.subr.mxu0 0.0
  %983 = vmatpush1.msra.mxu0 %v891
  %984 = vmatprep.subr.mxu0 0.0
  %985 = vmatpush1.msra.mxu0 %v892
  %986 = vmatprep.subr.mxu0 0.0
  %987 = vmatpush1.msra.mxu0 %v893
  %988 = vmatprep.subr.mxu0 0.0
  %989 = vmatpush1.msra.mxu0 %v894
  %990 = vmatprep.subr.mxu0 0.0
  %991 = vmatpush1.msra.mxu0 %v895
  %992 = vmatprep.subr.mxu0 0.0
  %993 = vmatpush1.msra.mxu0 %v896
  %994 = vmatprep.subr.mxu0 0.0
  %995 = vmatpush1.msra.mxu0 %v897
  %996 = vmatprep.mubr.f32.mxu0 %v15
  %997 = vmatmul.mubr.f32.gmra.mrb[0].mxu0 %v14
  %v998 = vpop.f32.mrb[0].mxu0
  %v999 = vadd.f32 0.0, %v998
  %v1000 = vpop.f32.mrb[0].mxu0
  %1001 = vmatprep.mubr.f32.mxu0 %v19
  %1002 = vmatmul.mubr.f32.gmra.mrb[0].mxu0 %v18
  %v1003 = vpop.f32.mrb[0].mxu0
  %v1004 = vadd.f32 0.0, %v1003
  %v1005 = vpop.f32.mrb[0].mxu0
  %1006 = vmatprep.mubr.f32.mxu0 %v23
  %1007 = vmatmul.mubr.f32.gmra.mrb[0].mxu0 %v22
  %v1008 = vpop.f32.mrb[0].mxu0
  %v1009 = vadd.f32 0.0, %v1008
  %v1010 = vpop.f32.mrb[0].mxu0
  %1011 = vmatprep.mubr.f32.mxu0 %v27
  %1012 = vmatmul.mubr.f32.gmra.mrb[0].mxu0 %v26
  %v1013 = vpop.f32.mrb[0].mxu0
  %v1014 = vadd.f32 0.0, %v1013
  %v1015 = vpop.f32.mrb[0].mxu0
  %1016 = vmatprep.mubr.f32.mxu0 %v31
  %1017 = vmatmul.mubr.f32.gmra.mrb[0].mxu0 %v30
  %v1018 = vpop.f32.mrb[0].mxu0
  %v1019 = vadd.f32 0.0, %v1018
  %v1020 = vpop.f32.mrb[0].mxu0
  %1021 = vmatprep.mubr.f32.mxu0 %v35
  %1022 = vmatmul.mubr.f32.gmra.mrb[0].mxu0 %v34
  %v1023 = vpop.f32.mrb[0].mxu0
  %v1024 = vadd.f32 0.0, %v1023
  %v1025 = vpop.f32.mrb[0].mxu0
  %1026 = vmatprep.mubr.f32.mxu0 %v39
  %1027 = vmatmul.mubr.f32.gmra.mrb[0].mxu0 %v38
  %v1028 = vpop.f32.mrb[0].mxu0
  %v1029 = vadd.f32 0.0, %v1028
  %v1030 = vpop.f32.mrb[0].mxu0
  %1031 = vdwg.mxu0
  %1032 = vmatprep.subr.mxu0 0.0
  %1033 = vmatpush1.msra.mxu0 %v898
  %1034 = vmatprep.subr.mxu0 0.0
  %1035 = vmatpush1.msra.mxu0 %v899
  %1036 = vmatprep.subr.mxu0 0.0
  %1037 = vmatpush1.msra.mxu0 %v900
  %1038 = vmatprep.subr.mxu0 0.0
  %1039 = vmatpush1.msra.mxu0 %v901
  %1040 = vmatprep.subr.mxu0 0.0
  %1041 = vmatpush1.msra.mxu0 %v902
  %1042 = vmatprep.subr.mxu0 0.0
  %1043 = vmatpush1.msra.mxu0 %v903
  %1044 = vmatprep.subr.mxu0 0.0
  %1045 = vmatpush1.msra.mxu0 %v904
  %1046 = vmatprep.subr.mxu0 0.0
  %1047 = vmatpush1.msra.mxu0 %v905
  %1048 = vmatprep.subr.mxu0 0.0
  %1049 = vmatpush1.msra.mxu0 %v906
  %1050 = vmatprep.subr.mxu0 0.0
  %1051 = vmatpush1.msra.mxu0 %v907
  %1052 = vmatprep.subr.mxu0 0.0
  %1053 = vmatpush1.msra.mxu0 %v908
  %1054 = vmatprep.subr.mxu0 0.0
  %1055 = vmatpush1.msra.mxu0 %v909
  %1056 = vmatprep.subr.mxu0 0.0
  %1057 = vmatpush1.msra.mxu0 %v910
  %1058 = vmatprep.subr.mxu0 0.0
  %1059 = vmatpush1.msra.mxu0 %v911
  %1060 = vmatprep.subr.mxu0 0.0
  %1061 = vmatpush1.msra.mxu0 %v912
  %1062 = vmatprep.subr.mxu0 0.0
  %1063 = vmatpush1.msra.mxu0 %v913
  %1064 = vmatprep.subr.mxu0 0.0
  %1065 = vmatpush1.msra.mxu0 %v914
  %1066 = vmatprep.subr.mxu0 0.0
  %1067 = vmatpush1.msra.mxu0 %v915
  %1068 = vmatprep.subr.mxu0 0.0
  %1069 = vmatpush1.msra.mxu0 %v916
  %1070 = vmatprep.subr.mxu0 0.0
  %1071 = vmatpush1.msra.mxu0 %v917
  %1072 = vmatprep.subr.mxu0 0.0
  %1073 = vmatpush1.msra.mxu0 %v918
  %1074 = vmatprep.subr.mxu0 0.0
  %1075 = vmatpush1.msra.mxu0 %v919
  %1076 = vmatprep.subr.mxu0 0.0
  %1077 = vmatpush1.msra.mxu0 %v920
  %1078 = vmatprep.subr.mxu0 0.0
  %1079 = vmatpush1.msra.mxu0 %v921
  %1080 = vmatprep.subr.mxu0 0.0
  %1081 = vmatpush1.msra.mxu0 %v922
  %1082 = vmatprep.subr.mxu0 0.0
  %1083 = vmatpush1.msra.mxu0 %v923
  %1084 = vmatprep.subr.mxu0 0.0
  %1085 = vmatpush1.msra.mxu0 %v924
  %1086 = vmatprep.subr.mxu0 0.0
  %1087 = vmatpush1.msra.mxu0 %v925
  %1088 = vmatprep.subr.mxu0 0.0
  %1089 = vmatpush1.msra.mxu0 %v926
  %1090 = vmatprep.subr.mxu0 0.0
  %1091 = vmatpush1.msra.mxu0 %v927
  %1092 = vmatprep.subr.mxu0 0.0
  %1093 = vmatpush1.msra.mxu0 %v930
  %1094 = vmatprep.subr.mxu0 0.0
  %1095 = vmatpush1.msra.mxu0 0.0
  %1096 = vmatprep.mubr.f32.mxu0 %v107
  %1097 = vmatmul.mubr.f32.gmra.mrb[0].mxu0 %v16
  %v1098 = vpop.f32.mrb[0].mxu0
  %v1099 = vadd.f32 %v999, %v1098
  %v1100 = vpop.f32.mrb[0].mxu0
  %1101 = vmatprep.mubr.f32.mxu0 %v110
  %1102 = vmatmul.mubr.f32.gmra.mrb[0].mxu0 %v20
  %v1103 = vpop.f32.mrb[0].mxu0
  %v1104 = vadd.f32 %v1004, %v1103
  %v1105 = vpop.f32.mrb[0].mxu0
  %1106 = vmatprep.mubr.f32.mxu0 %v113
  %1107 = vmatmul.mubr.f32.gmra.mrb[0].mxu0 %v24
  %v1108 = vpop.f32.mrb[0].mxu0
  %v1109 = vadd.f32 %v1009, %v1108
  %v1110 = vpop.f32.mrb[0].mxu0
  %1111 = vmatprep.mubr.f32.mxu0 %v116
  %1112 = vmatmul.mubr.f32.gmra.mrb[0].mxu0 %v28
  %v1113 = vpop.f32.mrb[0].mxu0
  %v1114 = vadd.f32 %v1014, %v1113
  %v1115 = vpop.f32.mrb[0].mxu0
  %1116 = vmatprep.mubr.f32.mxu0 %v119
  %1117 = vmatmul.mubr.f32.gmra.mrb[0].mxu0 %v32
  %v1118 = vpop.f32.mrb[0].mxu0
  %v1119 = vadd.f32 %v1019, %v1118
  %v1120 = vpop.f32.mrb[0].mxu0
  %1121 = vmatprep.mubr.f32.mxu0 %v122
  %1122 = vmatmul.mubr.f32.gmra.mrb[0].mxu0 %v36
  %v1123 = vpop.f32.mrb[0].mxu0
  %v1124 = vadd.f32 %v1024, %v1123
  %v1125 = vpop.f32.mrb[0].mxu0
  %1126 = vmatprep.mubr.f32.mxu0 %v125
  %1127 = vmatmul.mubr.f32.gmra.mrb[0].mxu0 %v40
  %v1128 = vpop.f32.mrb[0].mxu0
  %v1129 = vadd.f32 %v1029, %v1128
  %v1130 = vpop.f32.mrb[0].mxu0
  %1131 = vdwg.mxu0
  %v1132 = vmax.f32 %v298, %v565
  %v1133 = vmax.f32 %v303, %v570
  %v1134 = vmax.f32 %v308, %v575
  %v1135 = vmax.f32 %v313, %v580
  %v1136 = vmax.f32 %v318, %v585
  %v1137 = vmax.f32 %v323, %v590
  %v1138 = vmax.f32 %v328, %v595
  %v1139 = vmax.f32 %v832, %v1099
  %v1140 = vmax.f32 %v837, %v1104
  %v1141 = vmax.f32 %v842, %v1109
  %v1142 = vmax.f32 %v847, %v1114
  %v1143 = vmax.f32 %v852, %v1119
  %v1144 = vmax.f32 %v857, %v1124
  %v1145 = vmax.f32 %v862, %v1129
  %v1146 = vmax.f32 %v1132, %v1139
  %v1147 = vmax.f32 %v1133, %v1140
  %v1148 = vmax.f32 %v1134, %v1141
  %v1149 = vmax.f32 %v1135, %v1142
  %v1150 = vmax.f32 %v1136, %v1143
  %v1151 = vmax.f32 %v1137, %v1144
  %v1152 = vmax.f32 %v1138, %v1145
  %v1153 = vld [vmem:[%s1] sm:$0xff]
  %v1154 = vld [vmem:[%s1 + $0x8] sm:$0xff]
  %v1155 = vld [vmem:[%s1 + $0x10] sm:$0xff]
  %v1156 = vld [vmem:[%s1 + $0x18] sm:$0xff]
  %v1157 = vld [vmem:[%s1 + $0x20] sm:$0xff]
  %v1158 = vld [vmem:[%s1 + $0x28] sm:$0xff]
  %v1159 = vld [vmem:[%s1 + $0x30] sm:$0x3]
  %1161 = vset.pattern.permute.xlu0 0
  %1162 = vperm.xlu0 %1161, %v1153
  %v1163 = vpop.permute.xlu0 %1162
  %1166 = vset.pattern.permute.xlu0 0
  %1167 = vperm.xlu0 %1166, %v1154
  %v1168 = vpop.permute.xlu0 %1167
  %1171 = vset.pattern.permute.xlu0 0
  %1172 = vperm.xlu0 %1171, %v1155
  %v1173 = vpop.permute.xlu0 %1172
  %1176 = vset.pattern.permute.xlu0 0
  %1177 = vperm.xlu0 %1176, %v1156
  %v1178 = vpop.permute.xlu0 %1177
  %1181 = vset.pattern.permute.xlu0 0
  %1182 = vperm.xlu0 %1181, %v1157
  %v1183 = vpop.permute.xlu0 %1182
  %1186 = vset.pattern.permute.xlu0 0
  %1187 = vperm.xlu0 %1186, %v1158
  %v1188 = vpop.permute.xlu0 %1187
  %1191 = vset.pattern.permute.xlu0 0
  %1192 = vperm.xlu0 %1191, %v1159
  %v1193 = vpop.permute.xlu0 %1192
  %v1195 = vadd.f32 %v1146, %v1163
  %v1196 = vadd.f32 %v1147, %v1168
  %v1197 = vadd.f32 %v1148, %v1173
  %v1198 = vadd.f32 %v1149, %v1178
  %v1199 = vadd.f32 %v1150, %v1183
  %v1200 = vadd.f32 %v1151, %v1188
  %v1201 = vadd.f32 %v1152, %v1193
  %vm1202 = vcmask 261120
  %1203 = vst.msk [vmem:[%s3] sm:$0xff] %vm1202, %v1195
  %1204 = vst.msk [vmem:[%s3 + $0x8] sm:$0xff] %vm1202, %v1196
  %1205 = vst.msk [vmem:[%s3 + $0x10] sm:$0xff] %vm1202, %v1197
  %1206 = vst.msk [vmem:[%s3 + $0x18] sm:$0xff] %vm1202, %v1198
  %1207 = vst.msk [vmem:[%s3 + $0x20] sm:$0xff] %vm1202, %v1199
  %1208 = vst.msk [vmem:[%s3 + $0x28] sm:$0xff] %vm1202, %v1200
  %vm1209 = vcmask 254976
  %1210 = vst.msk [vmem:[%s3 + $0x30] sm:$0x3] %vm1209, %v1201
  // Predicated region
  $region14: #{lenet_forward.4} parent=0 // pred_check
    _
  $region15: #{lenet_forward.4} parent=0 // pred_check_branch
    %1212 = sbr.rel (0) target = $region17
  $region16: #{lenet_forward.4} parent=0 // pred_region
    _
  $region17: #{lenet_forward.4} parent=0 // pred_fallthru
    _
  // Predicated region
  $region18: #{lenet_forward.4} parent=0 // pred_check
    _
  $region19: #{lenet_forward.4} parent=0 // pred_check_branch
    %1214 = sbr.rel (0) target = $region21
  $region20: #{lenet_forward.4} parent=0 // pred_region
    _
  $region21: #{lenet_forward.4} parent=0 // pred_fallthru
    _

// kernel: lenet_forward.5
$region0: #{lenet_forward.5}
  #allocation0 [shape = 'u32[]', space=smem, size = 0x4, offset = 0x4, fixed_abs, tag = 'smem constant byte address 0x4 - core index']
  #allocation1 [shape = 'u32[144,128]{1,0:T(1,128)}', space=vmem, size = 0x12000, scoped, tag = 'internal scratch']
  %s0 = inlined_call_operand.vmem [shape: f32[32,800], index: 0, kind: input, shape index: {}]
  %s1 = inlined_call_operand.vmem [shape: f32[32,1], index: 1, kind: input, shape index: {}]
  %s2 = inlined_call_operand.vmem [shape: f32[10,32], index: 2, kind: input, shape index: {}]
  %s3 = inlined_call_operand.vmem [shape: f32[10,1], index: 3, kind: input, shape index: {}]
  %s4 = inlined_call_operand.vmem [shape: f32[800,2], index: 4, kind: input, shape index: {}]
  %s5 = inlined_call_operand.vmem [shape: f32[10,2], index: 5, kind: output, shape index: {}]
  %s6 = sld [smem:[#allocation0]]
  $region30: #{lenet_forward.5} parent=0
    _
  %s8 = ssub.s32 1, %s6
  %s9 = scalar_select 0, %s8, %s6
  // Predicated region
  $region2: #{lenet_forward.5} parent=0 // pred_check
    _
  $region3: #{lenet_forward.5} parent=0 // pred_check_branch
    %11 = sbr.rel (0) target = $region5
  $region4: #{lenet_forward.5} parent=0 // pred_region
    _
  $region5: #{lenet_forward.5} parent=0 // pred_fallthru
    _
  // Predicated region
  $region6: #{lenet_forward.5} parent=0 // pred_check
    _
  $region7: #{lenet_forward.5} parent=0 // pred_check_branch
    %13 = sbr.rel (0) target = $region9
  $region8: #{lenet_forward.5} parent=0 // pred_region
    _
  $region9: #{lenet_forward.5} parent=0 // pred_fallthru
    _
  // Predicated region
  $region10: #{lenet_forward.5} parent=0 // pred_check
    _
  $region11: #{lenet_forward.5} parent=0 // pred_check_branch
    %15 = sbr.rel (0) target = $region13
  $region12: #{lenet_forward.5} parent=0 // pred_region
    _
  $region13: #{lenet_forward.5} parent=0 // pred_fallthru
    _
  // Predicated region
  $region14: #{lenet_forward.5} parent=0 // pred_check
    _
  $region15: #{lenet_forward.5} parent=0 // pred_check_branch
    %17 = sbr.rel (0) target = $region17
  $region16: #{lenet_forward.5} parent=0 // pred_region
    _
  $region17: #{lenet_forward.5} parent=0 // pred_fallthru
    _
  // Predicated region
  $region18: #{lenet_forward.5} parent=0 // pred_check
    _
  $region19: #{lenet_forward.5} parent=0 // pred_check_branch
    %19 = sbr.rel (0) target = $region21
  $region20: #{lenet_forward.5} parent=0 // pred_region
    _
  $region21: #{lenet_forward.5} parent=0 // pred_fallthru
    _
  %v20 = vld [vmem:[%s0] sm:$0xff]
  %v21 = vld [vmem:[%s0 + $0x8] sm:$0xff]
  %v22 = vld [vmem:[%s0 + $0x10] sm:$0xff]
  %v23 = vld [vmem:[%s0 + $0x18] sm:$0xff]
  %v24 = vld [vmem:[%s0 + $0x20] sm:$0xff]
  %v25 = vld [vmem:[%s0 + $0x28] sm:$0xff]
  %v26 = vld [vmem:[%s0 + $0x30] sm:$0xff]
  %v27 = vld [vmem:[%s0 + $0x38] sm:$0xff]
  %v28 = vld [vmem:[%s0 + $0x40] sm:$0xff]
  %v29 = vld [vmem:[%s0 + $0x48] sm:$0xff]
  %v30 = vld [vmem:[%s0 + $0x50] sm:$0xff]
  %v31 = vld [vmem:[%s0 + $0x58] sm:$0xff]
  %v32 = vld [vmem:[%s0 + $0x60] sm:$0xff]
  %v33 = vld [vmem:[%s0 + $0x68] sm:$0xff]
  %v34 = vld [vmem:[%s0 + $0x70] sm:$0xff]
  %v35 = vld [vmem:[%s0 + $0x78] sm:$0xff]
  %v36 = vld [vmem:[%s0 + $0x80] sm:$0xff]
  %v37 = vld [vmem:[%s0 + $0x88] sm:$0xff]
  %v38 = vld [vmem:[%s0 + $0x90] sm:$0xff]
  %v39 = vld [vmem:[%s0 + $0x98] sm:$0xff]
  %v40 = vld [vmem:[%s0 + $0xa0] sm:$0xff]
  %v41 = vld [vmem:[%s0 + $0xa8] sm:$0xff]
  %v42 = vld [vmem:[%s0 + $0xb0] sm:$0xff]
  %v43 = vld [vmem:[%s0 + $0xb8] sm:$0xff]
  %v44 = vld [vmem:[%s0 + $0xc0] sm:$0xff]
  %v45 = vld [vmem:[%s0 + $0xc8] sm:$0xff]
  %v46 = vld [vmem:[%s0 + $0xd0] sm:$0xff]
  %v47 = vld [vmem:[%s0 + $0xd8] sm:$0xff]
  %v48 = vld [vmem:[%s4] sm:$0xff]
  %v49 = vld [vmem:[%s4 + $0x8] sm:$0xff]
  %v50 = vld [vmem:[%s4 + $0x10] sm:$0xff]
  %v51 = vld [vmem:[%s4 + $0x18] sm:$0xff]
  %v52 = vld [vmem:[%s4 + $0x20] sm:$0xff]
  %v53 = vld [vmem:[%s4 + $0x28] sm:$0xff]
  %v54 = vld [vmem:[%s4 + $0x30] sm:$0xff]
  %v55 = vld [vmem:[%s4 + $0x38] sm:$0xff]
  %v56 = vld [vmem:[%s4 + $0x40] sm:$0xff]
  %v57 = vld [vmem:[%s4 + $0x48] sm:$0xff]
  %v58 = vld [vmem:[%s4 + $0x50] sm:$0xff]
  %v59 = vld [vmem:[%s4 + $0x58] sm:$0xff]
  %v60 = vld [vmem:[%s4 + $0x60] sm:$0xff]
  %v61 = vld [vmem:[%s4 + $0x68] sm:$0xff]
  %v62 = vld [vmem:[%s4 + $0x70] sm:$0xff]
  %v63 = vld [vmem:[%s4 + $0x78] sm:$0xff]
  %v64 = vld [vmem:[%s4 + $0x80] sm:$0xff]
  %v65 = vld [vmem:[%s4 + $0x88] sm:$0xff]
  %v66 = vld [vmem:[%s4 + $0x90] sm:$0xff]
  %v67 = vld [vmem:[%s4 + $0x98] sm:$0xff]
  %v68 = vld [vmem:[%s4 + $0xa0] sm:$0xff]
  %v69 = vld [vmem:[%s4 + $0xa8] sm:$0xff]
  %v70 = vld [vmem:[%s4 + $0xb0] sm:$0xff]
  %v71 = vld [vmem:[%s4 + $0xb8] sm:$0xff]
  %v72 = vld [vmem:[%s4 + $0xc0] sm:$0xff]
  %v73 = vld [vmem:[%s4 + $0xc8] sm:$0xff]
  %v74 = vld [vmem:[%s4 + $0xd0] sm:$0xff]
  %v75 = vld [vmem:[%s4 + $0xd8] sm:$0xff]
  %v76 = vld [vmem:[%s4 + $0xe0] sm:$0xff]
  %v77 = vld [vmem:[%s4 + $0xe8] sm:$0xff]
  %v78 = vld [vmem:[%s4 + $0xf0] sm:$0xff]
  %v79 = vld [vmem:[%s4 + $0xf8] sm:$0xff]
  %v80 = vld [vmem:[%s4 + $0x100] sm:$0xff]
  %v81 = vld [vmem:[%s4 + $0x108] sm:$0xff]
  %v82 = vld [vmem:[%s4 + $0x110] sm:$0xff]
  %v83 = vld [vmem:[%s4 + $0x118] sm:$0xff]
  %v84 = vld [vmem:[%s4 + $0x120] sm:$0xff]
  %v85 = vld [vmem:[%s4 + $0x128] sm:$0xff]
  %v86 = vld [vmem:[%s4 + $0x130] sm:$0xff]
  %v87 = vld [vmem:[%s4 + $0x138] sm:$0xff]
  %v88 = vld [vmem:[%s4 + $0x140] sm:$0xff]
  %v89 = vld [vmem:[%s4 + $0x148] sm:$0xff]
  %v90 = vld [vmem:[%s4 + $0x150] sm:$0xff]
  %v91 = vld [vmem:[%s4 + $0x158] sm:$0xff]
  %v92 = vld [vmem:[%s4 + $0x160] sm:$0xff]
  %v93 = vld [vmem:[%s4 + $0x168] sm:$0xff]
  %v94 = vld [vmem:[%s4 + $0x170] sm:$0xff]
  %v95 = vld [vmem:[%s4 + $0x178] sm:$0xff]
  %v96 = vld [vmem:[%s4 + $0x180] sm:$0xff]
  %v97 = vld [vmem:[%s4 + $0x188] sm:$0xff]
  %v98 = vld [vmem:[%s4 + $0x190] sm:$0xff]
  %v99 = vld [vmem:[%s4 + $0x198] sm:$0xff]
  %v100 = vld [vmem:[%s4 + $0x1a0] sm:$0xff]
  %v101 = vld [vmem:[%s4 + $0x1a8] sm:$0xff]
  %v102 = vld [vmem:[%s4 + $0x1b0] sm:$0xff]
  %v103 = vld [vmem:[%s4 + $0x1b8] sm:$0xff]
  %v104 = vld [vmem:[%s4 + $0x1c0] sm:$0xff]
  %v105 = vld [vmem:[%s4 + $0x1c8] sm:$0xff]
  %v106 = vld [vmem:[%s4 + $0x1d0] sm:$0xff]
  %v107 = vld [vmem:[%s4 + $0x1d8] sm:$0xff]
  %v108 = vld [vmem:[%s4 + $0x1e0] sm:$0xff]
  %v109 = vld [vmem:[%s4 + $0x1e8] sm:$0xff]
  %v110 = vld [vmem:[%s4 + $0x1f0] sm:$0xff]
  %v111 = vld [vmem:[%s4 + $0x1f8] sm:$0xff]
  %v112 = vld [vmem:[%s4 + $0x200] sm:$0xff]
  %v113 = vld [vmem:[%s4 + $0x208] sm:$0xff]
  %v114 = vld [vmem:[%s4 + $0x210] sm:$0xff]
  %v115 = vld [vmem:[%s4 + $0x218] sm:$0xff]
  %v116 = vld [vmem:[%s4 + $0x220] sm:$0xff]
  %v117 = vld [vmem:[%s4 + $0x228] sm:$0xff]
  %v118 = vld [vmem:[%s4 + $0x230] sm:$0xff]
  %v119 = vld [vmem:[%s4 + $0x238] sm:$0xff]
  %v120 = vld [vmem:[%s4 + $0x240] sm:$0xff]
  %v121 = vld [vmem:[%s4 + $0x248] sm:$0xff]
  %v122 = vld [vmem:[%s4 + $0x250] sm:$0xff]
  %v123 = vld [vmem:[%s4 + $0x258] sm:$0xff]
  %v124 = vld [vmem:[%s4 + $0x260] sm:$0xff]
  %v125 = vld [vmem:[%s4 + $0x268] sm:$0xff]
  %v126 = vld [vmem:[%s4 + $0x270] sm:$0xff]
  %v127 = vld [vmem:[%s4 + $0x278] sm:$0xff]
  %v128 = vld [vmem:[%s4 + $0x280] sm:$0xff]
  %v129 = vld [vmem:[%s4 + $0x288] sm:$0xff]
  %v130 = vld [vmem:[%s4 + $0x290] sm:$0xff]
  %v131 = vld [vmem:[%s4 + $0x298] sm:$0xff]
  %v132 = vld [vmem:[%s4 + $0x2a0] sm:$0xff]
  %v133 = vld [vmem:[%s4 + $0x2a8] sm:$0xff]
  %v134 = vld [vmem:[%s4 + $0x2b0] sm:$0xff]
  %v135 = vld [vmem:[%s4 + $0x2b8] sm:$0xff]
  %v136 = vld [vmem:[%s4 + $0x2c0] sm:$0xff]
  %v137 = vld [vmem:[%s4 + $0x2c8] sm:$0xff]
  %v138 = vld [vmem:[%s4 + $0x2d0] sm:$0xff]
  %v139 = vld [vmem:[%s4 + $0x2d8] sm:$0xff]
  %v140 = vld [vmem:[%s4 + $0x2e0] sm:$0xff]
  %v141 = vld [vmem:[%s4 + $0x2e8] sm:$0xff]
  %v142 = vld [vmem:[%s4 + $0x2f0] sm:$0xff]
  %v143 = vld [vmem:[%s4 + $0x2f8] sm:$0xff]
  %v144 = vld [vmem:[%s4 + $0x300] sm:$0xff]
  %v145 = vld [vmem:[%s4 + $0x308] sm:$0xff]
  %v146 = vld [vmem:[%s4 + $0x310] sm:$0xff]
  %v147 = vld [vmem:[%s4 + $0x318] sm:$0xff]
  %v148 = vld [vmem:[%s1] sm:$0xff]
  %v149 = vld [vmem:[%s1 + $0x8] sm:$0xff]
  %v150 = vld [vmem:[%s1 + $0x10] sm:$0xff]
  %v151 = vld [vmem:[%s1 + $0x18] sm:$0xff]
  %153 = vset.pattern.permute.xlu0 0
  %154 = vperm.xlu0 %153, %v148
  %v155 = vpop.permute.xlu0 %154
  %158 = vset.pattern.permute.xlu0 0
  %159 = vperm.xlu0 %158, %v149
  %v160 = vpop.permute.xlu0 %159
  %163 = vset.pattern.permute.xlu0 0
  %164 = vperm.xlu0 %163, %v150
  %v165 = vpop.permute.xlu0 %164
  %168 = vset.pattern.permute.xlu0 0
  %169 = vperm.xlu0 %168, %v151
  %v170 = vpop.permute.xlu0 %169
  %vm172 = vcmask 261120
  %v174 = vsel %vm172, %v26, 0
  %v177 = vsel %vm172, %v33, 0
  %v180 = vsel %vm172, %v40, 0
  %v183 = vsel %vm172, %v47, 0
  %185 = vmatprep.subr.mxu0 0.0
  %186 = vmatpush1.msra.mxu0 %v48
  %187 = vmatprep.subr.mxu0 0.0
  %188 = vmatpush1.msra.mxu0 %v49
  %189 = vmatprep.subr.mxu0 0.0
  %190 = vmatpush1.msra.mxu0 %v50
  %191 = vmatprep.subr.mxu0 0.0
  %192 = vmatpush1.msra.mxu0 %v51
  %193 = vmatprep.subr.mxu0 0.0
  %194 = vmatpush1.msra.mxu0 %v52
  %195 = vmatprep.subr.mxu0 0.0
  %196 = vmatpush1.msra.mxu0 %v53
  %197 = vmatprep.subr.mxu0 0.0
  %198 = vmatpush1.msra.mxu0 %v54
  %199 = vmatprep.subr.mxu0 0.0
  %200 = vmatpush1.msra.mxu0 %v55
  %201 = vmatprep.subr.mxu0 0.0
  %202 = vmatpush1.msra.mxu0 %v56
  %203 = vmatprep.subr.mxu0 0.0
  %204 = vmatpush1.msra.mxu0 %v57
  %205 = vmatprep.subr.mxu0 0.0
  %206 = vmatpush1.msra.mxu0 %v58
  %207 = vmatprep.subr.mxu0 0.0
  %208 = vmatpush1.msra.mxu0 %v59
  %209 = vmatprep.subr.mxu0 0.0
  %210 = vmatpush1.msra.mxu0 %v60
  %211 = vmatprep.subr.mxu0 0.0
  %212 = vmatpush1.msra.mxu0 %v61
  %213 = vmatprep.subr.mxu0 0.0
  %214 = vmatpush1.msra.mxu0 %v62
  %215 = vmatprep.subr.mxu0 0.0
  %216 = vmatpush1.msra.mxu0 %v63
  %217 = vmatprep.subr.mxu0 0.0
  %218 = vmatpush1.msra.mxu0 %v64
  %219 = vmatprep.subr.mxu0 0.0
  %220 = vmatpush1.msra.mxu0 %v65
  %221 = vmatprep.subr.mxu0 0.0
  %222 = vmatpush1.msra.mxu0 %v66
  %223 = vmatprep.subr.mxu0 0.0
  %224 = vmatpush1.msra.mxu0 %v67
  %225 = vmatprep.subr.mxu0 0.0
  %226 = vmatpush1.msra.mxu0 %v68
  %227 = vmatprep.subr.mxu0 0.0
  %228 = vmatpush1.msra.mxu0 %v69
  %229 = vmatprep.subr.mxu0 0.0
  %230 = vmatpush1.msra.mxu0 %v70
  %231 = vmatprep.subr.mxu0 0.0
  %232 = vmatpush1.msra.mxu0 %v71
  %233 = vmatprep.subr.mxu0 0.0
  %234 = vmatpush1.msra.mxu0 %v72
  %235 = vmatprep.subr.mxu0 0.0
  %236 = vmatpush1.msra.mxu0 %v73
  %237 = vmatprep.subr.mxu0 0.0
  %238 = vmatpush1.msra.mxu0 %v74
  %239 = vmatprep.subr.mxu0 0.0
  %240 = vmatpush1.msra.mxu0 %v75
  %241 = vmatprep.subr.mxu0 0.0
  %242 = vmatpush1.msra.mxu0 %v76
  %243 = vmatprep.subr.mxu0 0.0
  %244 = vmatpush1.msra.mxu0 %v77
  %245 = vmatprep.subr.mxu0 0.0
  %246 = vmatpush1.msra.mxu0 %v78
  %247 = vmatprep.subr.mxu0 0.0
  %248 = vmatpush1.msra.mxu0 %v79
  %249 = vmatprep.mubr.f32.mxu0 %v21
  %250 = vmatmul.mubr.f32.gmra.mrb[0].mxu0 %v20
  %v251 = vpop.f32.mrb[0].mxu0
  %v252 = vadd.f32 %v155, %v251
  %v253 = vpop.f32.mrb[0].mxu0
  %254 = vmatprep.mubr.f32.mxu0 %v28
  %255 = vmatmul.mubr.f32.gmra.mrb[0].mxu0 %v27
  %v256 = vpop.f32.mrb[0].mxu0
  %v257 = vadd.f32 %v160, %v256
  %v258 = vpop.f32.mrb[0].mxu0
  %259 = vmatprep.mubr.f32.mxu0 %v35
  %260 = vmatmul.mubr.f32.gmra.mrb[0].mxu0 %v34
  %v261 = vpop.f32.mrb[0].mxu0
  %v262 = vadd.f32 %v165, %v261
  %v263 = vpop.f32.mrb[0].mxu0
  %264 = vmatprep.mubr.f32.mxu0 %v42
  %265 = vmatmul.mubr.f32.gmra.mrb[0].mxu0 %v41
  %v266 = vpop.f32.mrb[0].mxu0
  %v267 = vadd.f32 %v170, %v266
  %v268 = vpop.f32.mrb[0].mxu0
  %269 = vdwg.mxu0
  %270 = vmatprep.subr.mxu0 0.0
  %271 = vmatpush1.msra.mxu0 %v80
  %272 = vmatprep.subr.mxu0 0.0
  %273 = vmatpush1.msra.mxu0 %v81
  %274 = vmatprep.subr.mxu0 0.0
  %275 = vmatpush1.msra.mxu0 %v82
  %276 = vmatprep.subr.mxu0 0.0
  %277 = vmatpush1.msra.mxu0 %v83
  %278 = vmatprep.subr.mxu0 0.0
  %279 = vmatpush1.msra.mxu0 %v84
  %280 = vmatprep.subr.mxu0 0.0
  %281 = vmatpush1.msra.mxu0 %v85
  %282 = vmatprep.subr.mxu0 0.0
  %283 = vmatpush1.msra.mxu0 %v86
  %284 = vmatprep.subr.mxu0 0.0
  %285 = vmatpush1.msra.mxu0 %v87
  %286 = vmatprep.subr.mxu0 0.0
  %287 = vmatpush1.msra.mxu0 %v88
  %288 = vmatprep.subr.mxu0 0.0
  %289 = vmatpush1.msra.mxu0 %v89
  %290 = vmatprep.subr.mxu0 0.0
  %291 = vmatpush1.msra.mxu0 %v90
  %292 = vmatprep.subr.mxu0 0.0
  %293 = vmatpush1.msra.mxu0 %v91
  %294 = vmatprep.subr.mxu0 0.0
  %295 = vmatpush1.msra.mxu0 %v92
  %296 = vmatprep.subr.mxu0 0.0
  %297 = vmatpush1.msra.mxu0 %v93
  %298 = vmatprep.subr.mxu0 0.0
  %299 = vmatpush1.msra.mxu0 %v94
  %300 = vmatprep.subr.mxu0 0.0
  %301 = vmatpush1.msra.mxu0 %v95
  %302 = vmatprep.subr.mxu0 0.0
  %303 = vmatpush1.msra.mxu0 %v96
  %304 = vmatprep.subr.mxu0 0.0
  %305 = vmatpush1.msra.mxu0 %v97
  %306 = vmatprep.subr.mxu0 0.0
  %307 = vmatpush1.msra.mxu0 %v98
  %308 = vmatprep.subr.mxu0 0.0
  %309 = vmatpush1.msra.mxu0 %v99
  %310 = vmatprep.subr.mxu0 0.0
  %311 = vmatpush1.msra.mxu0 %v100
  %312 = vmatprep.subr.mxu0 0.0
  %313 = vmatpush1.msra.mxu0 %v101
  %314 = vmatprep.subr.mxu0 0.0
  %315 = vmatpush1.msra.mxu0 %v102
  %316 = vmatprep.subr.mxu0 0.0
  %317 = vmatpush1.msra.mxu0 %v103
  %318 = vmatprep.subr.mxu0 0.0
  %319 = vmatpush1.msra.mxu0 %v104
  %320 = vmatprep.subr.mxu0 0.0
  %321 = vmatpush1.msra.mxu0 %v105
  %322 = vmatprep.subr.mxu0 0.0
  %323 = vmatpush1.msra.mxu0 %v106
  %324 = vmatprep.subr.mxu0 0.0
  %325 = vmatpush1.msra.mxu0 %v107
  %326 = vmatprep.subr.mxu0 0.0
  %327 = vmatpush1.msra.mxu0 %v108
  %328 = vmatprep.subr.mxu0 0.0
  %329 = vmatpush1.msra.mxu0 %v109
  %330 = vmatprep.subr.mxu0 0.0
  %331 = vmatpush1.msra.mxu0 %v110
  %332 = vmatprep.subr.mxu0 0.0
  %333 = vmatpush1.msra.mxu0 %v111
  %334 = vmatprep.mubr.f32.mxu0 %v23
  %335 = vmatmul.mubr.f32.gmra.mrb[0].mxu0 %v22
  %v336 = vpop.f32.mrb[0].mxu0
  %v337 = vadd.f32 %v252, %v336
  %v338 = vpop.f32.mrb[0].mxu0
  %339 = vmatprep.mubr.f32.mxu0 %v30
  %340 = vmatmul.mubr.f32.gmra.mrb[0].mxu0 %v29
  %v341 = vpop.f32.mrb[0].mxu0
  %v342 = vadd.f32 %v257, %v341
  %v343 = vpop.f32.mrb[0].mxu0
  %344 = vmatprep.mubr.f32.mxu0 %v37
  %345 = vmatmul.mubr.f32.gmra.mrb[0].mxu0 %v36
  %v346 = vpop.f32.mrb[0].mxu0
  %v347 = vadd.f32 %v262, %v346
  %v348 = vpop.f32.mrb[0].mxu0
  %349 = vmatprep.mubr.f32.mxu0 %v44
  %350 = vmatmul.mubr.f32.gmra.mrb[0].mxu0 %v43
  %v351 = vpop.f32.mrb[0].mxu0
  %v352 = vadd.f32 %v267, %v351
  %v353 = vpop.f32.mrb[0].mxu0
  %354 = vdwg.mxu0
  %355 = vmatprep.subr.mxu0 0.0
  %356 = vmatpush1.msra.mxu0 %v112
  %357 = vmatprep.subr.mxu0 0.0
  %358 = vmatpush1.msra.mxu0 %v113
  %359 = vmatprep.subr.mxu0 0.0
  %360 = vmatpush1.msra.mxu0 %v114
  %361 = vmatprep.subr.mxu0 0.0
  %362 = vmatpush1.msra.mxu0 %v115
  %363 = vmatprep.subr.mxu0 0.0
  %364 = vmatpush1.msra.mxu0 %v116
  %365 = vmatprep.subr.mxu0 0.0
  %366 = vmatpush1.msra.mxu0 %v117
  %367 = vmatprep.subr.mxu0 0.0
  %368 = vmatpush1.msra.mxu0 %v118
  %369 = vmatprep.subr.mxu0 0.0
  %370 = vmatpush1.msra.mxu0 %v119
  %371 = vmatprep.subr.mxu0 0.0
  %372 = vmatpush1.msra.mxu0 %v120
  %373 = vmatprep.subr.mxu0 0.0
  %374 = vmatpush1.msra.mxu0 %v121
  %375 = vmatprep.subr.mxu0 0.0
  %376 = vmatpush1.msra.mxu0 %v122
  %377 = vmatprep.subr.mxu0 0.0
  %378 = vmatpush1.msra.mxu0 %v123
  %379 = vmatprep.subr.mxu0 0.0
  %380 = vmatpush1.msra.mxu0 %v124
  %381 = vmatprep.subr.mxu0 0.0
  %382 = vmatpush1.msra.mxu0 %v125
  %383 = vmatprep.subr.mxu0 0.0
  %384 = vmatpush1.msra.mxu0 %v126
  %385 = vmatprep.subr.mxu0 0.0
  %386 = vmatpush1.msra.mxu0 %v127
  %387 = vmatprep.subr.mxu0 0.0
  %388 = vmatpush1.msra.mxu0 %v128
  %389 = vmatprep.subr.mxu0 0.0
  %390 = vmatpush1.msra.mxu0 %v129
  %391 = vmatprep.subr.mxu0 0.0
  %392 = vmatpush1.msra.mxu0 %v130
  %393 = vmatprep.subr.mxu0 0.0
  %394 = vmatpush1.msra.mxu0 %v131
  %395 = vmatprep.subr.mxu0 0.0
  %396 = vmatpush1.msra.mxu0 %v132
  %397 = vmatprep.subr.mxu0 0.0
  %398 = vmatpush1.msra.mxu0 %v133
  %399 = vmatprep.subr.mxu0 0.0
  %400 = vmatpush1.msra.mxu0 %v134
  %401 = vmatprep.subr.mxu0 0.0
  %402 = vmatpush1.msra.mxu0 %v135
  %403 = vmatprep.subr.mxu0 0.0
  %404 = vmatpush1.msra.mxu0 %v136
  %405 = vmatprep.subr.mxu0 0.0
  %406 = vmatpush1.msra.mxu0 %v137
  %407 = vmatprep.subr.mxu0 0.0
  %408 = vmatpush1.msra.mxu0 %v138
  %409 = vmatprep.subr.mxu0 0.0
  %410 = vmatpush1.msra.mxu0 %v139
  %411 = vmatprep.subr.mxu0 0.0
  %412 = vmatpush1.msra.mxu0 %v140
  %413 = vmatprep.subr.mxu0 0.0
  %414 = vmatpush1.msra.mxu0 %v141
  %415 = vmatprep.subr.mxu0 0.0
  %416 = vmatpush1.msra.mxu0 %v142
  %417 = vmatprep.subr.mxu0 0.0
  %418 = vmatpush1.msra.mxu0 %v143
  %419 = vmatprep.mubr.f32.mxu0 %v25
  %420 = vmatmul.mubr.f32.gmra.mrb[0].mxu0 %v24
  %v421 = vpop.f32.mrb[0].mxu0
  %v422 = vadd.f32 %v337, %v421
  %v423 = vpop.f32.mrb[0].mxu0
  %424 = vmatprep.mubr.f32.mxu0 %v32
  %425 = vmatmul.mubr.f32.gmra.mrb[0].mxu0 %v31
  %v426 = vpop.f32.mrb[0].mxu0
  %v427 = vadd.f32 %v342, %v426
  %v428 = vpop.f32.mrb[0].mxu0
  %429 = vmatprep.mubr.f32.mxu0 %v39
  %430 = vmatmul.mubr.f32.gmra.mrb[0].mxu0 %v38
  %v431 = vpop.f32.mrb[0].mxu0
  %v432 = vadd.f32 %v347, %v431
  %v433 = vpop.f32.mrb[0].mxu0
  %434 = vmatprep.mubr.f32.mxu0 %v46
  %435 = vmatmul.mubr.f32.gmra.mrb[0].mxu0 %v45
  %v436 = vpop.f32.mrb[0].mxu0
  %v437 = vadd.f32 %v352, %v436
  %v438 = vpop.f32.mrb[0].mxu0
  %439 = vdwg.mxu0
  %440 = vmatprep.subr.mxu0 0.0
  %441 = vmatpush1.msra.mxu0 %v144
  %442 = vmatprep.subr.mxu0 0.0
  %443 = vmatpush1.msra.mxu0 %v145
  %444 = vmatprep.subr.mxu0 0.0
  %445 = vmatpush1.msra.mxu0 %v146
  %446 = vmatprep.subr.mxu0 0.0
  %447 = vmatpush1.msra.mxu0 %v147
  %448 = vmatprep.subr.mxu0 0.0
  %449 = vmatpush1.msra.mxu0 0.0
  %450 = vmatprep.subr.mxu0 0.0
  %451 = vmatpush1.msra.mxu0 0.0
  %452 = vmatprep.subr.mxu0 0.0
  %453 = vmatpush1.msra.mxu0 0.0
  %454 = vmatprep.subr.mxu0 0.0
  %455 = vmatpush1.msra.mxu0 0.0
  %456 = vmatprep.subr.mxu0 0.0
  %457 = vmatpush1.msra.mxu0 0.0
  %458 = vmatprep.subr.mxu0 0.0
  %459 = vmatpush1.msra.mxu0 0.0
  %460 = vmatprep.subr.mxu0 0.0
  %461 = vmatpush1.msra.mxu0 0.0
  %462 = vmatprep.subr.mxu0 0.0
  %463 = vmatpush1.msra.mxu0 0.0
  %464 = vmatprep.subr.mxu0 0.0
  %465 = vmatpush1.msra.mxu0 0.0
  %466 = vmatprep.subr.mxu0 0.0
  %467 = vmatpush1.msra.mxu0 0.0
  %468 = vmatprep.subr.mxu0 0.0
  %469 = vmatpush1.msra.mxu0 0.0
  %470 = vmatprep.subr.mxu0 0.0
  %471 = vmatpush1.msra.mxu0 0.0
  %472 = vmatprep.subr.mxu0 0.0
  %473 = vmatpush1.msra.mxu0 0.0
  %474 = vmatprep.subr.mxu0 0.0
  %475 = vmatpush1.msra.mxu0 0.0
  %476 = vmatprep.subr.mxu0 0.0
  %477 = vmatpush1.msra.mxu0 0.0
  %478 = vmatprep.subr.mxu0 0.0
  %479 = vmatpush1.msra.mxu0 0.0
  %480 = vmatprep.subr.mxu0 0.0
  %481 = vmatpush1.msra.mxu0 0.0
  %482 = vmatprep.subr.mxu0 0.0
  %483 = vmatpush1.msra.mxu0 0.0
  %484 = vmatprep.subr.mxu0 0.0
  %485 = vmatpush1.msra.mxu0 0.0
  %486 = vmatprep.subr.mxu0 0.0
  %487 = vmatpush1.msra.mxu0 0.0
  %488 = vmatprep.subr.mxu0 0.0
  %489 = vmatpush1.msra.mxu0 0.0
  %490 = vmatprep.subr.mxu0 0.0
  %491 = vmatpush1.msra.mxu0 0.0
  %492 = vmatprep.subr.mxu0 0.0
  %493 = vmatpush1.msra.mxu0 0.0
  %494 = vmatprep.subr.mxu0 0.0
  %495 = vmatpush1.msra.mxu0 0.0
  %496 = vmatprep.subr.mxu0 0.0
  %497 = vmatpush1.msra.mxu0 0.0
  %498 = vmatprep.subr.mxu0 0.0
  %499 = vmatpush1.msra.mxu0 0.0
  %500 = vmatprep.subr.mxu0 0.0
  %501 = vmatpush1.msra.mxu0 0.0
  %502 = vmatprep.subr.mxu0 0.0
  %503 = vmatpush1.msra.mxu0 0.0
  %504 = vmatprep.mubr.f32.mxu0 0.0
  %505 = vmatmul.mubr.f32.gmra.mrb[0].mxu0 %v174
  %v506 = vpop.f32.mrb[0].mxu0
  %v507 = vadd.f32 %v422, %v506
  %v508 = vpop.f32.mrb[0].mxu0
  %509 = vmatprep.mubr.f32.mxu0 0.0
  %510 = vmatmul.mubr.f32.gmra.mrb[0].mxu0 %v177
  %v511 = vpop.f32.mrb[0].mxu0
  %v512 = vadd.f32 %v427, %v511
  %v513 = vpop.f32.mrb[0].mxu0
  %514 = vmatprep.mubr.f32.mxu0 0.0
  %515 = vmatmul.mubr.f32.gmra.mrb[0].mxu0 %v180
  %v516 = vpop.f32.mrb[0].mxu0
  %v517 = vadd.f32 %v432, %v516
  %v518 = vpop.f32.mrb[0].mxu0
  %519 = vmatprep.mubr.f32.mxu0 0.0
  %520 = vmatmul.mubr.f32.gmra.mrb[0].mxu0 %v183
  %v521 = vpop.f32.mrb[0].mxu0
  %v522 = vadd.f32 %v437, %v521
  %v523 = vpop.f32.mrb[0].mxu0
  %524 = vdwg.mxu0
  %v525 = vmax.f32 %v507, 0.0
  %v526 = vmax.f32 %v512, 0.0
  %v527 = vmax.f32 %v517, 0.0
  %v528 = vmax.f32 %v522, 0.0
  %v529 = vld [vmem:[%s2] sm:$0xff]
  %v530 = vld [vmem:[%s2 + $0x8] sm:$0x3]
  %v531 = vld [vmem:[%s3] sm:$0xff]
  %v532 = vld [vmem:[%s3 + $0x8] sm:$0x3]
  %534 = vset.pattern.permute.xlu0 0
  %535 = vperm.xlu0 %534, %v531
  %v536 = vpop.permute.xlu0 %535
  %539 = vset.pattern.permute.xlu0 0
  %540 = vperm.xlu0 %539, %v532
  %v541 = vpop.permute.xlu0 %540
  %v544 = vsel %vm172, %v529, 0
  %v547 = vsel %vm172, %v530, 0
  %549 = vmatprep.subr.mxu0 0.0
  %550 = vmatpush1.msra.mxu0 %v525
  %551 = vmatprep.subr.mxu0 0.0
  %552 = vmatpush1.msra.mxu0 %v526
  %553 = vmatprep.subr.mxu0 0.0
  %554 = vmatpush1.msra.mxu0 %v527
  %555 = vmatprep.subr.mxu0 0.0
  %556 = vmatpush1.msra.mxu0 %v528
  %557 = vmatprep.subr.mxu0 0.0
  %558 = vmatpush1.msra.mxu0 0.0
  %559 = vmatprep.subr.mxu0 0.0
  %560 = vmatpush1.msra.mxu0 0.0
  %561 = vmatprep.subr.mxu0 0.0
  %562 = vmatpush1.msra.mxu0 0.0
  %563 = vmatprep.subr.mxu0 0.0
  %564 = vmatpush1.msra.mxu0 0.0
  %565 = vmatprep.subr.mxu0 0.0
  %566 = vmatpush1.msra.mxu0 0.0
  %567 = vmatprep.subr.mxu0 0.0
  %568 = vmatpush1.msra.mxu0 0.0
  %569 = vmatprep.subr.mxu0 0.0
  %570 = vmatpush1.msra.mxu0 0.0
  %571 = vmatprep.subr.mxu0 0.0
  %572 = vmatpush1.msra.mxu0 0.0
  %573 = vmatprep.subr.mxu0 0.0
  %574 = vmatpush1.msra.mxu0 0.0
  %575 = vmatprep.subr.mxu0 0.0
  %576 = vmatpush1.msra.mxu0 0.0
  %577 = vmatprep.subr.mxu0 0.0
  %578 = vmatpush1.msra.mxu0 0.0
  %579 = vmatprep.subr.mxu0 0.0
  %580 = vmatpush1.msra.mxu0 0.0
  %581 = vmatprep.subr.mxu0 0.0
  %582 = vmatpush1.msra.mxu0 0.0
  %583 = vmatprep.subr.mxu0 0.0
  %584 = vmatpush1.msra.mxu0 0.0
  %585 = vmatprep.subr.mxu0 0.0
  %586 = vmatpush1.msra.mxu0 0.0
  %587 = vmatprep.subr.mxu0 0.0
  %588 = vmatpush1.msra.mxu0 0.0
  %589 = vmatprep.subr.mxu0 0.0
  %590 = vmatpush1.msra.mxu0 0.0
  %591 = vmatprep.subr.mxu0 0.0
  %592 = vmatpush1.msra.mxu0 0.0
  %593 = vmatprep.subr.mxu0 0.0
  %594 = vmatpush1.msra.mxu0 0.0
  %595 = vmatprep.subr.mxu0 0.0
  %596 = vmatpush1.msra.mxu0 0.0
  %597 = vmatprep.subr.mxu0 0.0
  %598 = vmatpush1.msra.mxu0 0.0
  %599 = vmatprep.subr.mxu0 0.0
  %600 = vmatpush1.msra.mxu0 0.0
  %601 = vmatprep.subr.mxu0 0.0
  %602 = vmatpush1.msra.mxu0 0.0
  %603 = vmatprep.subr.mxu0 0.0
  %604 = vmatpush1.msra.mxu0 0.0
  %605 = vmatprep.subr.mxu0 0.0
  %606 = vmatpush1.msra.mxu0 0.0
  %607 = vmatprep.subr.mxu0 0.0
  %608 = vmatpush1.msra.mxu0 0.0
  %609 = vmatprep.subr.mxu0 0.0
  %610 = vmatpush1.msra.mxu0 0.0
  %611 = vmatprep.subr.mxu0 0.0
  %612 = vmatpush1.msra.mxu0 0.0
  %613 = vmatprep.mubr.f32.mxu0 0.0
  %614 = vmatmul.mubr.f32.gmra.mrb[0].mxu0 %v544
  %v615 = vpop.f32.mrb[0].mxu0
  %v616 = vadd.f32 %v536, %v615
  %v617 = vpop.f32.mrb[0].mxu0
  %618 = vmatprep.mubr.f32.mxu0 0.0
  %619 = vmatmul.mubr.f32.gmra.mrb[0].mxu0 %v547
  %v620 = vpop.f32.mrb[0].mxu0
  %v621 = vadd.f32 %v541, %v620
  %v622 = vpop.f32.mrb[0].mxu0
  %623 = vdwg.mxu0
  %vm624 = vcmask 15360
  %v625 = vsel %vm624, %v616, -inf
  %vm626 = vcmask 9216
  %v627 = vsel %vm626, %v621, -inf
  %v628 = vmax.f32 %v625, %v627
  %v629 = vrot.slane %v628, 4
  %v630 = vmax.f32 %v628, %v629
  %v631 = vrot.slane %v630, 2
  %v632 = vmax.f32 %v630, %v631
  %v633 = vrot.slane %v632, 1
  %v634 = vmax.f32 %v632, %v633
  %v635 = vsub.f32 %v616, %v634
  %v636 = vsub.f32 %v621, %v634
  %v637 = vmul.f32 %v635, 1.442695
  %v638 = vpow.pop %v637
  %v639 = vmul.f32 %v636, 1.442695
  %v640 = vpow.pop %v639
  %v641 = vsel %vm624, %v638, 0.0
  %v642 = vsel %vm626, %v640, 0.0
  %v643 = vadd.f32 %v641, %v642
  %v644 = vrot.slane %v643, 4
  %v645 = vadd.f32 %v643, %v644
  %v646 = vrot.slane %v645, 2
  %v647 = vadd.f32 %v645, %v646
  %v648 = vrot.slane %v647, 1
  %v649 = vadd.f32 %v647, %v648
  %v650 = vlog2.pop %v649
  %v651 = vmul.f32 %v650, 0.6931472
  %v652 = vsub.f32 %v635, %v651
  %v653 = vsub.f32 %v636, %v651
  %654 = vst.msk [vmem:[%s5] sm:$0xff] %vm624, %v652
  %655 = vst.msk [vmem:[%s5 + $0x8] sm:$0x3] %vm626, %v653
  // Predicated region
  $region22: #{lenet_forward.5} parent=0 // pred_check
    _
  $region23: #{lenet_forward.5} parent=0 // pred_check_branch
    %657 = sbr.rel (0) target = $region25
  $region24: #{lenet_forward.5} parent=0 // pred_region
    _
  $region25: #{lenet_forward.5} parent=0 // pred_fallthru
    _
  // Predicated region
  $region26: #{lenet_forward.5} parent=0 // pred_check
    _
  $region27: #{lenet_forward.5} parent=0 // pred_check_branch
    %659 = sbr.rel (0) target = $region29
  $region28: #{lenet_forward.5} parent=0 // pred_region
    _
  $region29: #{lenet_forward.5} parent=0 // pred_fallthru
    _

</llo_original>
